<compile_context>
chip_gen: v7x
topology: tpu7x:2x2x1
jax: 0.10.0
libtpu: 0.0.40
codegen_flags: <defaults>
</compile_context>

<pallas_src>
import functools

import jax
import jax.numpy as jnp
from jax import lax
from jax.experimental import pallas as pl
from jax.experimental.pallas import tpu as pltpu

EXPANSION = 4
BN_EPS = 1e-5
LANE = 128


def _round_up(x, m):
    return (x + m - 1) // m * m


def _bottleneck_kernel(x_ref, w1_ref, b1_ref, w2_ref, b2_ref, w3_ref, b3_ref,
                       o_ref, *, H, W, TH, CP, PP, OP):
    """One (batch, h-tile) per grid step.

    x_ref : (1, H+2, W, CP) bf16  whole H-zero-padded image (resident across h-tiles)
    w1_ref: (CP, PP)   bf16       1x1 conv1 weight, BN1 scale folded in
    w2_ref: (9*PP, PP) bf16       3x3 conv2 weight as im2col matrix, BN2 folded in
    w3_ref: (PP, OP)   bf16       1x1 conv3 weight, BN3 scale folded in
    b*_ref: (1, C)     f32        folded BN biases
    o_ref : (1, TH, W, OP) f32
    """
    hi = pl.program_id(1)
    h0 = pl.multiple_of(hi * TH, TH)           # start row in H-padded image coords
    M = TH * W                                 # pixels per output tile
    MH = (TH + 2) * W                          # pixels incl. the 1-row halo each side

    # ---- conv1 (1x1) + bn1 + relu on the halo-extended row slab ------------------
    xh = x_ref[0, pl.ds(h0, TH + 2)]           # (TH+2, W, CP) bf16
    y1 = jnp.dot(xh.reshape(MH, CP), w1_ref[...],
                 preferred_element_type=jnp.float32)
    y1 = jnp.maximum(y1 + b1_ref[...], 0.0)    # (MH, PP) f32

    # The wrapper's H zero-padding runs through conv1's bias, so explicitly zero the
    # halo rows that fall outside the real image (only hits the first / last tile).
    row = lax.broadcasted_iota(jnp.int32, (TH + 2, W, PP), 0).reshape(MH, PP)
    g = row + h0                               # row index in padded-image coords
    y1 = jnp.where(jnp.logical_and(g >= 1, g <= H), y1, 0.0)

    # ---- conv2 (3x3, pad=1, stride=1) as a single im2col matmul ------------------
    # Column-validity masks for the dx = -1 / +1 taps (hoisted out of the loop).
    col = lax.broadcasted_iota(jnp.int32, (TH, W, PP), 1).reshape(M, PP)
    ok_m1 = col >= 1            # positions where w-1 is inside the image
    ok_p1 = col <= W - 2        # positions where w+1 is inside the image

    taps = []
    for dy in (-1, 0, 1):
        # Aligned sublane slice of the y1 slab (offsets 0, W, 2W rows).
        ys = y1[(1 + dy) * W:(1 + dy) * W + M]             # (M, PP) f32
        for dx in (-1, 0, 1):
            if dx == 0:
                t = ys
            else:
                # Shift along W via a sublane rotation of the flattened pixel axis;
                # positions that wrapped (w+dx outside [0, W)) are masked to zero,
                # which also implements the conv's zero padding along W.
                t = pltpu.roll(ys, shift=(-dx) % M, axis=0)
                t = jnp.where(ok_m1 if dx == -1 else ok_p1, t, 0.0)
            taps.append(t.astype(jnp.bfloat16))
    im2col = jnp.concatenate(taps, axis=-1)                # (M, 9*PP) bf16

    y2 = jnp.dot(im2col, w2_ref[...], preferred_element_type=jnp.float32)
    y2 = jnp.maximum(y2 + b2_ref[...], 0.0)                # (M, PP) f32

    # ---- conv3 (1x1) + bn3 + residual + relu --------------------------------------
    y3 = jnp.dot(y2.astype(jnp.bfloat16), w3_ref[...],
                 preferred_element_type=jnp.float32)
    res = x_ref[0, pl.ds(h0 + 1, TH)].astype(jnp.float32).reshape(M, CP)
    y3 = jnp.maximum(y3 + b3_ref[...] + res, 0.0)
    o_ref[0] = y3.reshape(TH, W, OP).astype(o_ref.dtype)


def fold_bn(gamma, beta, mean, var, eps=BN_EPS):
    scale = gamma / jnp.sqrt(var + eps)
    bias = beta - mean * scale
    return scale, bias


def bottleneck_pallas(x_nchw, params, tile_h=8):
    """Bottleneck forward (stride=1, downsample=None). NCHW in / NCHW out."""
    N, Cin, H, W = x_nchw.shape
    w1, w2, w3 = params["w1"], params["w2"], params["w3"]
    P = w1.shape[1]
    Cout = w3.shape[1]
    assert Cin == Cout, "residual add requires inplanes == planes * expansion"

    TH = tile_h if H % tile_h == 0 else H
    CP = _round_up(Cin, LANE)
    PP = _round_up(P, LANE)
    OP = _round_up(Cout, LANE)
    assert CP == OP

    s1, b1 = fold_bn(*params["bn1"])
    s2, b2 = fold_bn(*params["bn2"])
    s3, b3 = fold_bn(*params["bn3"])

    # Fold BN scales into the conv weights (per output channel), zero-pad channels to
    # lane width, cast matmul operands to bf16. Biases stay f32.
    w1p = jnp.zeros((CP, PP), jnp.float32).at[:Cin, :P].set(w1 * s1)
    w2p = jnp.zeros((3, 3, PP, PP), jnp.float32).at[:, :, :P, :P].set(
        w2 * s2[None, None, None, :])
    w3p = jnp.zeros((PP, OP), jnp.float32).at[:P, :Cout].set(w3 * s3)
    w1p = w1p.astype(jnp.bfloat16)
    w2p = w2p.reshape(9 * PP, PP).astype(jnp.bfloat16)     # tap-major im2col weight
    w3p = w3p.astype(jnp.bfloat16)

    b1p = jnp.zeros((1, PP), jnp.float32).at[0, :P].set(b1)
    b2p = jnp.zeros((1, PP), jnp.float32).at[0, :P].set(b2)
    b3p = jnp.zeros((1, OP), jnp.float32).at[0, :Cout].set(b3)

    # NCHW -> NHWC (channels on lanes), pad channels, add a 1-row zero halo in H.
    x = jnp.transpose(x_nchw, (0, 2, 3, 1))
    x = jnp.pad(x, ((0, 0), (1, 1), (0, 0), (0, CP - Cin))).astype(jnp.bfloat16)

    kernel = functools.partial(_bottleneck_kernel, H=H, W=W, TH=TH,
                               CP=CP, PP=PP, OP=OP)
    const = lambda shape: pl.BlockSpec(shape, lambda n, hi: (0,) * len(shape))

    out = pl.pallas_call(
        kernel,
        out_shape=jax.ShapeDtypeStruct((N, H, W, OP), jnp.float32),
        grid_spec=pltpu.PrefetchScalarGridSpec(
            num_scalar_prefetch=0,
            grid=(N, H // TH),
            in_specs=[
                # Full padded image per batch element; block index is constant along
                # the h-tile axis so it stays resident (one DMA per batch element).
                pl.BlockSpec((1, H + 2, W, CP), lambda n, hi: (n, 0, 0, 0)),
                const(w1p.shape), const(b1p.shape),
                const(w2p.shape), const(b2p.shape),
                const(w3p.shape), const(b3p.shape),
            ],
            out_specs=pl.BlockSpec((1, TH, W, OP), lambda n, hi: (n, hi, 0, 0)),
        ),
        compiler_params=pltpu.CompilerParams(
            dimension_semantics=("parallel", "parallel"),
            vmem_limit_bytes=32 * 1024 * 1024),
    )(x, w1p, b1p, w2p, b2p, w3p, b3p)

    out = out[..., :Cout]                        # drop lane padding
    return jnp.transpose(out, (0, 3, 1, 2))      # back to NCHW


# --------------------------- pure-JAX reference -----------------------------------
def _bn_ref(x, gamma, beta, mean, var, eps=BN_EPS):
    return (x - mean) / jnp.sqrt(var + eps) * gamma + beta


def _conv_ref(x, w, padding):
    return lax.conv_general_dilated(
        x, w, window_strides=(1, 1), padding=padding,
        dimension_numbers=("NHWC", "HWIO", "NHWC"))


def bottleneck_ref(x_nchw, params):
    x = jnp.transpose(x_nchw, (0, 2, 3, 1))
    w1, w2, w3 = params["w1"], params["w2"], params["w3"]
    out = _conv_ref(x, w1[None, None], "VALID")
    out = jnp.maximum(_bn_ref(out, *params["bn1"]), 0.0)
    out = _conv_ref(out, w2, "SAME")
    out = jnp.maximum(_bn_ref(out, *params["bn2"]), 0.0)
    out = _conv_ref(out, w3[None, None], "VALID")
    out = _bn_ref(out, *params["bn3"])
    out = jnp.maximum(out + x, 0.0)
    return jnp.transpose(out, (0, 3, 1, 2))


# -------------------------------- main ---------------------------------------------
if __name__ == "__main__":
    N, H, W = 2, 16, 16
    planes = 4
    inplanes = planes * EXPANSION        # 16
    outplanes = planes * EXPANSION       # 16

    key = jax.random.PRNGKey(0)
    keys = jax.random.split(key, 8)

    def bn_params(k, c):
        k1, k2, k3, k4 = jax.random.split(k, 4)
        gamma = 1.0 + 0.1 * jax.random.normal(k1, (c,), jnp.float32)
        beta = 0.1 * jax.random.normal(k2, (c,), jnp.float32)
        mean = 0.1 * jax.random.normal(k3, (c,), jnp.float32)
        var = 0.5 + jnp.abs(jax.random.normal(k4, (c,), jnp.float32))
        return gamma, beta, mean, var

    params = {
        # Conv weights in matmul / HWIO form (a PyTorch OIHW tensor would simply be
        # transposed into this layout).
        "w1": 0.1 * jax.random.normal(keys[0], (inplanes, planes), jnp.float32),
        "w2": 0.1 * jax.random.normal(keys[1], (3, 3, planes, planes), jnp.float32),
        "w3": 0.1 * jax.random.normal(keys[2], (planes, outplanes), jnp.float32),
        "bn1": bn_params(keys[3], planes),
        "bn2": bn_params(keys[4], planes),
        "bn3": bn_params(keys[5], outplanes),
    }

    x = jax.random.normal(keys[6], (N, inplanes, H, W), jnp.float32)
    # Pre-round the input to bf16 so the kernel (bf16 matmul operands) and the f32
    # reference see identical input values; remaining delta is bf16 weight/activation
    # rounding inside the kernel.
    x = x.astype(jnp.bfloat16).astype(jnp.float32)

    out = jax.block_until_ready(bottleneck_pallas(x, params))
    ref = bottleneck_ref(x, params)

    assert out.shape == ref.shape == (N, outplanes, H, W)
    max_err = float(jnp.max(jnp.abs(out - ref)))
    assert jnp.allclose(out, ref, atol=5e-2, rtol=5e-2), max_err

    print("KERNEL_OK")
</pallas_src>

<mosaic_0001>
module attributes {stable_mosaic.version = 11 : i64} {
  func.func @_bottleneck_kernel(%arg0: i32, %arg1: i32, %arg2: memref<1x18x16x128xbf16, #tpu.memory_space<vmem>>, %arg3: memref<128x128xbf16, #tpu.memory_space<vmem>>, %arg4: memref<1x128xf32, #tpu.memory_space<vmem>>, %arg5: memref<1152x128xbf16, #tpu.memory_space<vmem>>, %arg6: memref<1x128xf32, #tpu.memory_space<vmem>>, %arg7: memref<128x128xbf16, #tpu.memory_space<vmem>>, %arg8: memref<1x128xf32, #tpu.memory_space<vmem>>, %arg9: memref<1x8x16x128xf32, #tpu.memory_space<vmem>>) attributes {dimension_semantics = [#tpu.dimension_semantics<parallel>, #tpu.dimension_semantics<parallel>], iteration_bounds = array<i64: 2, 2>, scalar_prefetch = 0 : i64, scratch_operands = 0 : i64, tpu.core_type = #tpu.core_type<tc>, window_params = [{transform_indices = @transform_0, window_bounds = array<i64: 1, 18, 16, 128>}, {pipeline_mode = #tpu.pipeline_mode<synchronous>, transform_indices = @transform_1, window_bounds = array<i64: 128, 128>}, {pipeline_mode = #tpu.pipeline_mode<synchronous>, transform_indices = @transform_2, window_bounds = array<i64: 1, 128>}, {pipeline_mode = #tpu.pipeline_mode<synchronous>, transform_indices = @transform_3, window_bounds = array<i64: 1152, 128>}, {pipeline_mode = #tpu.pipeline_mode<synchronous>, transform_indices = @transform_4, window_bounds = array<i64: 1, 128>}, {pipeline_mode = #tpu.pipeline_mode<synchronous>, transform_indices = @transform_5, window_bounds = array<i64: 128, 128>}, {pipeline_mode = #tpu.pipeline_mode<synchronous>, transform_indices = @transform_6, window_bounds = array<i64: 1, 128>}, {transform_indices = @transform_7, window_bounds = array<i64: 1, 8, 16, 128>}]} {
    %c8_i32 = arith.constant 8 : i32
    %0 = arith.muli %arg1, %c8_i32 : i32
    %1 = tpu.assume_multiple %0, 8 : i32
    %c0 = arith.constant 0 : index
    %2 = arith.index_cast %1 : i32 to index
    %c0_0 = arith.constant 0 : index
    %c0_1 = arith.constant 0 : index
    %3 = vector.load %arg2[%c0, %2, %c0_0, %c0_1] : memref<1x18x16x128xbf16, #tpu.memory_space<vmem>>, vector<1x10x16x128xbf16>
    %4 = vector.shape_cast %3 : vector<1x10x16x128xbf16> to vector<10x16x128xbf16>
    %5 = vector.shape_cast %4 : vector<10x16x128xbf16> to vector<160x128xbf16>
    %c0_2 = arith.constant 0 : index
    %c0_3 = arith.constant 0 : index
    %6 = vector.load %arg3[%c0_2, %c0_3] : memref<128x128xbf16, #tpu.memory_space<vmem>>, vector<128x128xbf16>
    %cst = arith.constant dense<0.000000e+00> : vector<160x128xf32>
    %7 = tpu.matmul %5, %6, %cst {dimension_numbers = #tpu.dot_dimension_numbers<[1], [0], [0], [1], [0, 0, 1, 1], [], []>} : vector<160x128xbf16>, vector<128x128xbf16>, vector<160x128xf32> -> vector<160x128xf32>
    %c0_4 = arith.constant 0 : index
    %c0_5 = arith.constant 0 : index
    %8 = vector.load %arg4[%c0_4, %c0_5] : memref<1x128xf32, #tpu.memory_space<vmem>>, vector<1x128xf32>
    %9 = vector.broadcast %8 : vector<1x128xf32> to vector<160x128xf32>
    %10 = arith.addf %7, %9 : vector<160x128xf32>
    %cst_6 = arith.constant 0.000000e+00 : f32
    %11 = vector.broadcast %cst_6 : f32 to vector<160x128xf32>
    %12 = arith.maximumf %10, %11 : vector<160x128xf32>
    %13 = tpu.iota {dimensions = array<i32: 0>} : vector<10x16x128xi32>
    %14 = vector.shape_cast %13 : vector<10x16x128xi32> to vector<160x128xi32>
    %15 = vector.broadcast %1 : i32 to vector<160x128xi32>
    %16 = arith.addi %14, %15 : vector<160x128xi32>
    %c1_i32 = arith.constant 1 : i32
    %17 = vector.broadcast %c1_i32 : i32 to vector<160x128xi32>
    %18 = arith.cmpi sge, %16, %17 : vector<160x128xi32>
    %c16_i32 = arith.constant 16 : i32
    %19 = vector.broadcast %c16_i32 : i32 to vector<160x128xi32>
    %20 = arith.cmpi sle, %16, %19 : vector<160x128xi32>
    %21 = arith.andi %18, %20 : vector<160x128xi1>
    %cst_7 = arith.constant 0.000000e+00 : f32
    %22 = vector.broadcast %cst_7 : f32 to vector<160x128xf32>
    %23 = arith.select %21, %12, %22 : vector<160x128xi1>, vector<160x128xf32>
    %24 = tpu.iota {dimensions = array<i32: 1>} : vector<8x16x128xi32>
    %25 = vector.shape_cast %24 : vector<8x16x128xi32> to vector<128x128xi32>
    %c1_i32_8 = arith.constant 1 : i32
    %26 = vector.broadcast %c1_i32_8 : i32 to vector<128x128xi32>
    %27 = arith.cmpi sge, %25, %26 : vector<128x128xi32>
    %c14_i32 = arith.constant 14 : i32
    %28 = vector.broadcast %c14_i32 : i32 to vector<128x128xi32>
    %29 = arith.cmpi sle, %25, %28 : vector<128x128xi32>
    %30 = vector.extract_strided_slice %23 {offsets = [0, 0], sizes = [128, 128], strides = [1, 1]} : vector<160x128xf32> to vector<128x128xf32>
    %c1_i32_9 = arith.constant 1 : i32
    %31 = tpu.dynamic_rotate %30 by %c1_i32_9 dim 0 : vector<128x128xf32>, i32 -> vector<128x128xf32>
    %cst_10 = arith.constant 0.000000e+00 : f32
    %32 = vector.broadcast %cst_10 : f32 to vector<128x128xf32>
    %33 = arith.select %27, %31, %32 : vector<128x128xi1>, vector<128x128xf32>
    %34 = arith.truncf %33 : vector<128x128xf32> to vector<128x128xbf16>
    %35 = arith.truncf %30 : vector<128x128xf32> to vector<128x128xbf16>
    %c127_i32 = arith.constant 127 : i32
    %36 = tpu.dynamic_rotate %30 by %c127_i32 dim 0 : vector<128x128xf32>, i32 -> vector<128x128xf32>
    %cst_11 = arith.constant 0.000000e+00 : f32
    %37 = vector.broadcast %cst_11 : f32 to vector<128x128xf32>
    %38 = arith.select %29, %36, %37 : vector<128x128xi1>, vector<128x128xf32>
    %39 = arith.truncf %38 : vector<128x128xf32> to vector<128x128xbf16>
    %40 = vector.extract_strided_slice %23 {offsets = [16, 0], sizes = [128, 128], strides = [1, 1]} : vector<160x128xf32> to vector<128x128xf32>
    %c1_i32_12 = arith.constant 1 : i32
    %41 = tpu.dynamic_rotate %40 by %c1_i32_12 dim 0 : vector<128x128xf32>, i32 -> vector<128x128xf32>
    %cst_13 = arith.constant 0.000000e+00 : f32
    %42 = vector.broadcast %cst_13 : f32 to vector<128x128xf32>
    %43 = arith.select %27, %41, %42 : vector<128x128xi1>, vector<128x128xf32>
    %44 = arith.truncf %43 : vector<128x128xf32> to vector<128x128xbf16>
    %45 = arith.truncf %40 : vector<128x128xf32> to vector<128x128xbf16>
    %c127_i32_14 = arith.constant 127 : i32
    %46 = tpu.dynamic_rotate %40 by %c127_i32_14 dim 0 : vector<128x128xf32>, i32 -> vector<128x128xf32>
    %cst_15 = arith.constant 0.000000e+00 : f32
    %47 = vector.broadcast %cst_15 : f32 to vector<128x128xf32>
    %48 = arith.select %29, %46, %47 : vector<128x128xi1>, vector<128x128xf32>
    %49 = arith.truncf %48 : vector<128x128xf32> to vector<128x128xbf16>
    %50 = vector.extract_strided_slice %23 {offsets = [32, 0], sizes = [128, 128], strides = [1, 1]} : vector<160x128xf32> to vector<128x128xf32>
    %c1_i32_16 = arith.constant 1 : i32
    %51 = tpu.dynamic_rotate %50 by %c1_i32_16 dim 0 : vector<128x128xf32>, i32 -> vector<128x128xf32>
    %cst_17 = arith.constant 0.000000e+00 : f32
    %52 = vector.broadcast %cst_17 : f32 to vector<128x128xf32>
    %53 = arith.select %27, %51, %52 : vector<128x128xi1>, vector<128x128xf32>
    %54 = arith.truncf %53 : vector<128x128xf32> to vector<128x128xbf16>
    %55 = arith.truncf %50 : vector<128x128xf32> to vector<128x128xbf16>
    %c127_i32_18 = arith.constant 127 : i32
    %56 = tpu.dynamic_rotate %50 by %c127_i32_18 dim 0 : vector<128x128xf32>, i32 -> vector<128x128xf32>
    %cst_19 = arith.constant 0.000000e+00 : f32
    %57 = vector.broadcast %cst_19 : f32 to vector<128x128xf32>
    %58 = arith.select %29, %56, %57 : vector<128x128xi1>, vector<128x128xf32>
    %59 = arith.truncf %58 : vector<128x128xf32> to vector<128x128xbf16>
    %60 = tpu.concatenate %34, %35, %39, %44, %45, %49, %54, %55, %59 in 1 : vector<128x128xbf16>, vector<128x128xbf16>, vector<128x128xbf16>, vector<128x128xbf16>, vector<128x128xbf16>, vector<128x128xbf16>, vector<128x128xbf16>, vector<128x128xbf16>, vector<128x128xbf16> -> vector<128x1152xbf16>
    %c0_20 = arith.constant 0 : index
    %c0_21 = arith.constant 0 : index
    %61 = vector.load %arg5[%c0_20, %c0_21] : memref<1152x128xbf16, #tpu.memory_space<vmem>>, vector<1152x128xbf16>
    %cst_22 = arith.constant dense<0.000000e+00> : vector<128x128xf32>
    %62 = tpu.matmul %60, %61, %cst_22 {dimension_numbers = #tpu.dot_dimension_numbers<[1], [0], [0], [1], [0, 0, 1, 1], [], []>} : vector<128x1152xbf16>, vector<1152x128xbf16>, vector<128x128xf32> -> vector<128x128xf32>
    %c0_23 = arith.constant 0 : index
    %c0_24 = arith.constant 0 : index
    %63 = vector.load %arg6[%c0_23, %c0_24] : memref<1x128xf32, #tpu.memory_space<vmem>>, vector<1x128xf32>
    %64 = vector.broadcast %63 : vector<1x128xf32> to vector<128x128xf32>
    %65 = arith.addf %62, %64 : vector<128x128xf32>
    %cst_25 = arith.constant 0.000000e+00 : f32
    %66 = vector.broadcast %cst_25 : f32 to vector<128x128xf32>
    %67 = arith.maximumf %65, %66 : vector<128x128xf32>
    %68 = arith.truncf %67 : vector<128x128xf32> to vector<128x128xbf16>
    %c0_26 = arith.constant 0 : index
    %c0_27 = arith.constant 0 : index
    %69 = vector.load %arg7[%c0_26, %c0_27] : memref<128x128xbf16, #tpu.memory_space<vmem>>, vector<128x128xbf16>
    %cst_28 = arith.constant dense<0.000000e+00> : vector<128x128xf32>
    %70 = tpu.matmul %68, %69, %cst_28 {dimension_numbers = #tpu.dot_dimension_numbers<[1], [0], [0], [1], [0, 0, 1, 1], [], []>} : vector<128x128xbf16>, vector<128x128xbf16>, vector<128x128xf32> -> vector<128x128xf32>
    %c1_i32_29 = arith.constant 1 : i32
    %71 = arith.addi %1, %c1_i32_29 : i32
    %c0_30 = arith.constant 0 : index
    %72 = arith.index_cast %71 : i32 to index
    %c0_31 = arith.constant 0 : index
    %c0_32 = arith.constant 0 : index
    %73 = vector.load %arg2[%c0_30, %72, %c0_31, %c0_32] : memref<1x18x16x128xbf16, #tpu.memory_space<vmem>>, vector<1x8x16x128xbf16>
    %74 = vector.shape_cast %73 : vector<1x8x16x128xbf16> to vector<8x16x128xbf16>
    %75 = arith.extf %74 : vector<8x16x128xbf16> to vector<8x16x128xf32>
    %76 = vector.shape_cast %75 : vector<8x16x128xf32> to vector<128x128xf32>
    %c0_33 = arith.constant 0 : index
    %c0_34 = arith.constant 0 : index
    %77 = vector.load %arg8[%c0_33, %c0_34] : memref<1x128xf32, #tpu.memory_space<vmem>>, vector<1x128xf32>
    %78 = vector.broadcast %77 : vector<1x128xf32> to vector<128x128xf32>
    %79 = arith.addf %70, %78 : vector<128x128xf32>
    %80 = arith.addf %79, %76 : vector<128x128xf32>
    %cst_35 = arith.constant 0.000000e+00 : f32
    %81 = vector.broadcast %cst_35 : f32 to vector<128x128xf32>
    %82 = arith.maximumf %80, %81 : vector<128x128xf32>
    %83 = vector.shape_cast %82 : vector<128x128xf32> to vector<8x16x128xf32>
    %c0_36 = arith.constant 0 : index
    %c0_37 = arith.constant 0 : index
    %c0_38 = arith.constant 0 : index
    %c0_39 = arith.constant 0 : index
    %84 = vector.load %arg9[%c0_36, %c0_37, %c0_38, %c0_39] : memref<1x8x16x128xf32, #tpu.memory_space<vmem>>, vector<1x8x16x128xf32>
    %85 = vector.shape_cast %84 : vector<1x8x16x128xf32> to vector<8x16x128xf32>
    %86 = vector.shape_cast %83 : vector<8x16x128xf32> to vector<1x8x16x128xf32>
    tpu.vector_store %arg9[%c0_36, %c0_37, %c0_38, %c0_39], %86 {strides = array<i32>} : memref<1x8x16x128xf32, #tpu.memory_space<vmem>>, vector<1x8x16x128xf32>,
    return
  }
  func.func @transform_0(%arg0: i32, %arg1: i32) -> (i32, i32, i32, i32) {
    %c0_i32 = arith.constant 0 : i32
    %c0_i32_0 = arith.constant 0 : i32
    %c0_i32_1 = arith.constant 0 : i32
    %c0_i32_2 = arith.constant 0 : i32
    return %arg0, %c0_i32, %c0_i32_0, %c0_i32_1 : i32, i32, i32, i32
  }
  func.func @transform_1(%arg0: i32, %arg1: i32) -> (i32, i32) {
    %c0_i32 = arith.constant 0 : i32
    %c0_i32_0 = arith.constant 0 : i32
    %c0_i32_1 = arith.constant 0 : i32
    return %c0_i32, %c0_i32_0 : i32, i32
  }
  func.func @transform_2(%arg0: i32, %arg1: i32) -> (i32, i32) {
    %c0_i32 = arith.constant 0 : i32
    %c0_i32_0 = arith.constant 0 : i32
    %c0_i32_1 = arith.constant 0 : i32
    return %c0_i32, %c0_i32_0 : i32, i32
  }
  func.func @transform_3(%arg0: i32, %arg1: i32) -> (i32, i32) {
    %c0_i32 = arith.constant 0 : i32
    %c0_i32_0 = arith.constant 0 : i32
    %c0_i32_1 = arith.constant 0 : i32
    return %c0_i32, %c0_i32_0 : i32, i32
  }
  func.func @transform_4(%arg0: i32, %arg1: i32) -> (i32, i32) {
    %c0_i32 = arith.constant 0 : i32
    %c0_i32_0 = arith.constant 0 : i32
    %c0_i32_1 = arith.constant 0 : i32
    return %c0_i32, %c0_i32_0 : i32, i32
  }
  func.func @transform_5(%arg0: i32, %arg1: i32) -> (i32, i32) {
    %c0_i32 = arith.constant 0 : i32
    %c0_i32_0 = arith.constant 0 : i32
    %c0_i32_1 = arith.constant 0 : i32
    return %c0_i32, %c0_i32_0 : i32, i32
  }
  func.func @transform_6(%arg0: i32, %arg1: i32) -> (i32, i32) {
    %c0_i32 = arith.constant 0 : i32
    %c0_i32_0 = arith.constant 0 : i32
    %c0_i32_1 = arith.constant 0 : i32
    return %c0_i32, %c0_i32_0 : i32, i32
  }
  func.func @transform_7(%arg0: i32, %arg1: i32) -> (i32, i32, i32, i32) {
    %c0_i32 = arith.constant 0 : i32
    %c0_i32_0 = arith.constant 0 : i32
    %c0_i32_1 = arith.constant 0 : i32
    return %arg0, %arg1, %c0_i32, %c0_i32_0 : i32, i32, i32, i32
  }
}

</mosaic_0001>

<llo_original>
// kernel: tpu_custom_call.1
$region0: #{tpu_custom_call.1}
  #allocation0 [shape = 'u32[]', space=smem, size = 0x4, offset = 0x4, fixed_abs, tag = 'smem constant byte address 0x4 - core index']
  #allocation1 [shape = 'u32[144,128]{1,0:T(1,128)}', space=vmem, size = 0x12000, scoped, tag = 'internal scratch']
  %s0 = inlined_call_operand.hbm [shape: bf16[2,18,16,128], index: 0, kind: input, shape index: {}]
  %s1 = inlined_call_operand.hbm [shape: bf16[128,128], index: 1, kind: input, shape index: {}]
  %s2 = inlined_call_operand.vmem [shape: f32[1,128], index: 2, kind: input, shape index: {}]
  %s3 = inlined_call_operand.hbm [shape: bf16[1152,128], index: 3, kind: input, shape index: {}]
  %s4 = inlined_call_operand.vmem [shape: f32[1,128], index: 4, kind: input, shape index: {}]
  %s5 = inlined_call_operand.hbm [shape: bf16[128,128], index: 5, kind: input, shape index: {}]
  %s6 = inlined_call_operand.vmem [shape: f32[1,128], index: 6, kind: input, shape index: {}]
  %s7 = inlined_call_operand.hbm [shape: f32[2,16,16,128], index: 7, kind: output, shape index: {}]
  %s8 = sld [smem:[#allocation0]]
  $region77: #{tpu_custom_call.1} parent=0
    _
  %s10 = ssub.s32 1, %s8
  %s11 = scalar_select 0, %s10, %s8
  $region1: #{tpu_custom_call.1} parent=0
    #allocation2 [shape = 'u8[147456]{0}', space=vmem, size = 0x24000, scoped, tag = 'input window, operand 0']
    #allocation3 [shape = 's32[2]{0}', space=sflag, size = 0x8, scoped, tag = 'scoped memory for tpu_custom_call.1']
    #allocation4 [shape = 's32[2]{0}', space=sflag, size = 0x8, scoped, tag = 'scoped memory for tpu_custom_call.1']
    #allocation5 [shape = 'u8[32768]{0}', space=vmem, size = 0x8000, scoped, tag = 'input window, operand 1, single buffered']
    #allocation6 [shape = 's32[1]{0}', space=sflag, size = 0x4, scoped, tag = 'scoped memory for tpu_custom_call.1']
    #allocation7 [shape = 'u8[294912]{0}', space=vmem, size = 0x48000, scoped, tag = 'input window, operand 3, single buffered']
    #allocation8 [shape = 'u8[32768]{0}', space=vmem, size = 0x8000, scoped, tag = 'input window, operand 5, single buffered']
    #allocation9 [shape = 's32[1]{0}', space=sflag, size = 0x4, scoped, tag = 'scoped memory for tpu_custom_call.1']
    #allocation10 [shape = 'u8[131072]{0}', space=vmem, size = 0x20000, scoped, tag = 'output window, operand 0']
    %12 = vsyncpa [#allocation3], 0
    %s13 = scalar_lea.sflag [#allocation3], 1
    %14 = vsyncpa %s13, 0
    %15 = vsyncpa [#allocation6], 0
    %16 = vsyncpa [#allocation9], 0
    %17 = vsyncpa [#allocation4], 0
    %s18 = scalar_lea.sflag [#allocation4], 1
    %19 = vsyncpa %s18, 0
    loop: start=0, step=1, limit=6
    $region2: #{tpu_custom_call.1} parent=1 // loop_pre_header
      _
    $region3: #{tpu_custom_call.1} parent=1 // loop_header
      %s21 = sphi 0, %s25
      %p22 = scmp.ge.s32.totalorder %s21, 6
      %s28 = sphi 0, %s40
      %s29 = sphi 0, %s36
      %s30 = sphi 0, %s28
      %s31 = sphi 0, %s29
      %s32 = sphi 0, %s30
      %s33 = sphi 0, %s31
      %s43 = sphi 0, %s45
      %s46 = sphi 0, %s43
      %s47 = sphi 0, %s46
      %s63 = sphi 0, %s47
      %s67 = sphi 0, %s67
      %s69 = sphi 0, %s67
      %s70 = sphi 0, %s69
      %s84 = sphi 0, %s70
      %s88 = sphi 0, %s88
      %s90 = sphi 0, %s88
      %s91 = sphi 0, %s90
      %s105 = sphi 0, %s91
      %s109 = sphi 0, %s109
      %s111 = sphi 0, %s109
      %s112 = sphi 0, %s111
      %s126 = sphi 0, %s112
      %s130 = sphi 0, %s130
      %s132 = sphi 0, %s130
      %s133 = sphi 0, %s132
      %s147 = sphi 0, %s133
      %s151 = sphi 0, %s151
      %s153 = sphi 0, %s151
      %s154 = sphi 0, %s153
      %s168 = sphi 0, %s154
      %s172 = sphi 0, %s172
      %s174 = sphi 0, %s172
      %s175 = sphi 0, %s174
      %s189 = sphi 0, %s175
      %s197 = sphi 0, %s199
      %s200 = sphi 0, %s197
      %s201 = sphi 0, %s200
      %s217 = sphi 0, %s201
    $region4: #{tpu_custom_call.1} parent=1 // loop_header_branch
      %24 = sbr.rel (%p22) target = $region8
    $region5: #{tpu_custom_call.1} parent=1 // loop_body
      %s26 = ssub.s32 %s21, 1
      %s27 = ssub.s32 %s21, 2
      %s34 = sadd.s32 1, %s29
      %p35 = scmp.ge.s32.totalorder %s34, 2
      %s36 = scalar_select %p35, 0, %s34
      %s37 = sadd.s32 1, %s28
      %s38 = scalar_select %p35, %s37, %s28
      %p39 = scmp.ge.s32.totalorder %s38, 2
      %s40 = scalar_select %p39, 0, %s38
      %s41 = ssub.s32 %s28, %s40
      %p42 = scmp.eq.s32.totalorder %s41, 0
      %s44 = sadd.s32 %s43, 1
      %s45 = scalar_select %p42, %s43, %s44
      %p48 = pneg %p42
      %p49 = scmp.eq.s32.totalorder %s21, 3
      %p50 = por %p48, %p49
      %p51 = scmp.ne.s32.totalorder %s43, %s46
      %p52 = scmp.eq.s32.totalorder %s21, 0
      %p53 = por %p51, %p52
      %p54 = scmp.ne.s32.totalorder %s43, %s46
      %p55 = scmp.eq.s32.totalorder %s26, 3
      %p56 = por %p54, %p55
      %p57 = scmp.ne.s32.totalorder %s46, %s47
      %p58 = scmp.eq.s32.totalorder %s26, 0
      %p59 = por %p57, %p58
      %p60 = scmp.ne.s32.totalorder %s46, %s47
      %p61 = scmp.eq.s32.totalorder %s27, 3
      %p62 = por %p60, %p61
      %p64 = scmp.ne.s32.totalorder %s47, %s63
      %p65 = scmp.eq.s32.totalorder %s27, 0
      %p66 = por %p64, %p65
      %s68 = sadd.s32 %s67, 1
      %p71 = scmp.eq.s32.totalorder %s21, 3
      %p72 = scmp.ne.s32.totalorder %s67, %s69
      %p73 = scmp.eq.s32.totalorder %s21, 0
      %p74 = por %p72, %p73
      %p75 = scmp.ne.s32.totalorder %s67, %s69
      %p76 = scmp.eq.s32.totalorder %s26, 3
      %p77 = por %p75, %p76
      %p78 = scmp.ne.s32.totalorder %s69, %s70
      %p79 = scmp.eq.s32.totalorder %s26, 0
      %p80 = por %p78, %p79
      %p81 = scmp.ne.s32.totalorder %s69, %s70
      %p82 = scmp.eq.s32.totalorder %s27, 3
      %p83 = por %p81, %p82
      %p85 = scmp.ne.s32.totalorder %s70, %s84
      %p86 = scmp.eq.s32.totalorder %s27, 0
      %p87 = por %p85, %p86
      %s89 = sadd.s32 %s88, 1
      %p92 = scmp.eq.s32.totalorder %s21, 3
      %p93 = scmp.ne.s32.totalorder %s88, %s90
      %p94 = scmp.eq.s32.totalorder %s21, 0
      %p95 = por %p93, %p94
      %p96 = scmp.ne.s32.totalorder %s88, %s90
      %p97 = scmp.eq.s32.totalorder %s26, 3
      %p98 = por %p96, %p97
      %p99 = scmp.ne.s32.totalorder %s90, %s91
      %p100 = scmp.eq.s32.totalorder %s26, 0
      %p101 = por %p99, %p100
      %p102 = scmp.ne.s32.totalorder %s90, %s91
      %p103 = scmp.eq.s32.totalorder %s27, 3
      %p104 = por %p102, %p103
      %p106 = scmp.ne.s32.totalorder %s91, %s105
      %p107 = scmp.eq.s32.totalorder %s27, 0
      %p108 = por %p106, %p107
      %s110 = sadd.s32 %s109, 1
      %p113 = scmp.eq.s32.totalorder %s21, 3
      %p114 = scmp.ne.s32.totalorder %s109, %s111
      %p115 = scmp.eq.s32.totalorder %s21, 0
      %p116 = por %p114, %p115
      %p117 = scmp.ne.s32.totalorder %s109, %s111
      %p118 = scmp.eq.s32.totalorder %s26, 3
      %p119 = por %p117, %p118
      %p120 = scmp.ne.s32.totalorder %s111, %s112
      %p121 = scmp.eq.s32.totalorder %s26, 0
      %p122 = por %p120, %p121
      %p123 = scmp.ne.s32.totalorder %s111, %s112
      %p124 = scmp.eq.s32.totalorder %s27, 3
      %p125 = por %p123, %p124
      %p127 = scmp.ne.s32.totalorder %s112, %s126
      %p128 = scmp.eq.s32.totalorder %s27, 0
      %p129 = por %p127, %p128
      %s131 = sadd.s32 %s130, 1
      %p134 = scmp.eq.s32.totalorder %s21, 3
      %p135 = scmp.ne.s32.totalorder %s130, %s132
      %p136 = scmp.eq.s32.totalorder %s21, 0
      %p137 = por %p135, %p136
      %p138 = scmp.ne.s32.totalorder %s130, %s132
      %p139 = scmp.eq.s32.totalorder %s26, 3
      %p140 = por %p138, %p139
      %p141 = scmp.ne.s32.totalorder %s132, %s133
      %p142 = scmp.eq.s32.totalorder %s26, 0
      %p143 = por %p141, %p142
      %p144 = scmp.ne.s32.totalorder %s132, %s133
      %p145 = scmp.eq.s32.totalorder %s27, 3
      %p146 = por %p144, %p145
      %p148 = scmp.ne.s32.totalorder %s133, %s147
      %p149 = scmp.eq.s32.totalorder %s27, 0
      %p150 = por %p148, %p149
      %s152 = sadd.s32 %s151, 1
      %p155 = scmp.eq.s32.totalorder %s21, 3
      %p156 = scmp.ne.s32.totalorder %s151, %s153
      %p157 = scmp.eq.s32.totalorder %s21, 0
      %p158 = por %p156, %p157
      %p159 = scmp.ne.s32.totalorder %s151, %s153
      %p160 = scmp.eq.s32.totalorder %s26, 3
      %p161 = por %p159, %p160
      %p162 = scmp.ne.s32.totalorder %s153, %s154
      %p163 = scmp.eq.s32.totalorder %s26, 0
      %p164 = por %p162, %p163
      %p165 = scmp.ne.s32.totalorder %s153, %s154
      %p166 = scmp.eq.s32.totalorder %s27, 3
      %p167 = por %p165, %p166
      %p169 = scmp.ne.s32.totalorder %s154, %s168
      %p170 = scmp.eq.s32.totalorder %s27, 0
      %p171 = por %p169, %p170
      %s173 = sadd.s32 %s172, 1
      %p176 = scmp.eq.s32.totalorder %s21, 3
      %p177 = scmp.ne.s32.totalorder %s172, %s174
      %p178 = scmp.eq.s32.totalorder %s21, 0
      %p179 = por %p177, %p178
      %p180 = scmp.ne.s32.totalorder %s172, %s174
      %p181 = scmp.eq.s32.totalorder %s26, 3
      %p182 = por %p180, %p181
      %p183 = scmp.ne.s32.totalorder %s174, %s175
      %p184 = scmp.eq.s32.totalorder %s26, 0
      %p185 = por %p183, %p184
      %p186 = scmp.ne.s32.totalorder %s174, %s175
      %p187 = scmp.eq.s32.totalorder %s27, 3
      %p188 = por %p186, %p187
      %p190 = scmp.ne.s32.totalorder %s175, %s189
      %p191 = scmp.eq.s32.totalorder %s27, 0
      %p192 = por %p190, %p191
      %s193 = ssub.s32 %s28, %s40
      %s194 = ssub.s32 %s29, %s36
      %s195 = sor.u32 %s193, %s194
      %p196 = scmp.eq.s32.totalorder %s195, 0
      %s198 = sadd.s32 %s197, 1
      %s199 = scalar_select %p196, %s197, %s198
      %p202 = pneg %p196
      %p203 = scmp.eq.s32.totalorder %s21, 3
      %p204 = por %p202, %p203
      %p205 = scmp.ne.s32.totalorder %s197, %s200
      %p206 = scmp.eq.s32.totalorder %s21, 0
      %p207 = por %p205, %p206
      %p208 = scmp.ne.s32.totalorder %s197, %s200
      %p209 = scmp.eq.s32.totalorder %s26, 3
      %p210 = por %p208, %p209
      %p211 = scmp.ne.s32.totalorder %s200, %s201
      %p212 = scmp.eq.s32.totalorder %s26, 0
      %p213 = por %p211, %p212
      %p214 = scmp.ne.s32.totalorder %s200, %s201
      %p215 = scmp.eq.s32.totalorder %s27, 3
      %p216 = por %p214, %p215
      %p218 = scmp.ne.s32.totalorder %s201, %s217
      %p219 = scmp.eq.s32.totalorder %s27, 0
      %p220 = por %p218, %p219
      %p221 = scmp.le.s32.totalorder 1, %s21
      %p222 = scmp.lt.s32.totalorder %s21, 5
      %p223 = pnand %p221, %p222
      %p224 = pneg %p223
      // Predicated region
      $region9: #{tpu_custom_call.1} parent=5 // pred_check
        _
      $region10: #{tpu_custom_call.1} parent=5 // pred_check_branch
        %226 = sbr.rel (%p223) target = $region12
      $region11: #{tpu_custom_call.1} parent=5 // pred_region
        %s227 = ssub.s32 %s21, 1
        // Predicated region
        $region13: #{tpu_custom_call.1} parent=11 // pred_check
          %p228 = pneg %p80
        $region14: #{tpu_custom_call.1} parent=11 // pred_check_branch
          %230 = sbr.rel (%p228) target = $region16
        $region15: #{tpu_custom_call.1} parent=11 // pred_region
          %s232 = ssub.s32 1024, 1024
          %233 = vsyncadd [#allocation6], %s232
          %s234 = sshll.u32 [#allocation5], 4
          %s235 = int_to_ptr.vmem [resolvable:$true] %s234
          %240 = dma.hbm_to_vmem [thread:$0]  %s1, 1024, %s235, [#allocation6], 64, 64, 4
        $region16: #{tpu_custom_call.1} parent=11 // pred_fallthru
          _
        // Predicated region
        $region17: #{tpu_custom_call.1} parent=11 // pred_check
          %p241 = pneg %p101
        $region18: #{tpu_custom_call.1} parent=11 // pred_check_branch
          %243 = sbr.rel (%p241) target = $region20
        $region19: #{tpu_custom_call.1} parent=11 // pred_region
          _
        $region20: #{tpu_custom_call.1} parent=11 // pred_fallthru
          _
        // Predicated region
        $region21: #{tpu_custom_call.1} parent=11 // pred_check
          %p244 = pneg %p122
        $region22: #{tpu_custom_call.1} parent=11 // pred_check_branch
          %246 = sbr.rel (%p244) target = $region24
        $region23: #{tpu_custom_call.1} parent=11 // pred_region
          %s248 = ssub.s32 9216, 9216
          %249 = vsyncadd [#allocation6], %s248
          %s250 = sshll.u32 [#allocation7], 4
          %s251 = int_to_ptr.vmem [resolvable:$true] %s250
          %256 = dma.hbm_to_vmem [thread:$0]  %s3, 9216, %s251, [#allocation6], 64, 64, 4
        $region24: #{tpu_custom_call.1} parent=11 // pred_fallthru
          _
        // Predicated region
        $region25: #{tpu_custom_call.1} parent=11 // pred_check
          %p257 = pneg %p143
        $region26: #{tpu_custom_call.1} parent=11 // pred_check_branch
          %259 = sbr.rel (%p257) target = $region28
        $region27: #{tpu_custom_call.1} parent=11 // pred_region
          _
        $region28: #{tpu_custom_call.1} parent=11 // pred_fallthru
          _
        // Predicated region
        $region29: #{tpu_custom_call.1} parent=11 // pred_check
          %p260 = pneg %p164
        $region30: #{tpu_custom_call.1} parent=11 // pred_check_branch
          %262 = sbr.rel (%p260) target = $region32
        $region31: #{tpu_custom_call.1} parent=11 // pred_region
          %s264 = ssub.s32 1024, 1024
          %265 = vsyncadd [#allocation9], %s264
          %s266 = sshll.u32 [#allocation8], 4
          %s267 = int_to_ptr.vmem [resolvable:$true] %s266
          %272 = dma.hbm_to_vmem [thread:$0]  %s5, 1024, %s267, [#allocation9], 64, 64, 4
        $region32: #{tpu_custom_call.1} parent=11 // pred_fallthru
          _
        // Predicated region
        $region33: #{tpu_custom_call.1} parent=11 // pred_check
          %p273 = pneg %p185
        $region34: #{tpu_custom_call.1} parent=11 // pred_check_branch
          %275 = sbr.rel (%p273) target = $region36
        $region35: #{tpu_custom_call.1} parent=11 // pred_region
          _
        $region36: #{tpu_custom_call.1} parent=11 // pred_fallthru
          _
      $region12: #{tpu_custom_call.1} parent=5 // pred_fallthru
        _
      %p276 = scmp.lt.s32.totalorder %s21, 4
      // Predicated region
      $region37: #{tpu_custom_call.1} parent=5 // pred_check
        %p277 = pneg %p276
      $region38: #{tpu_custom_call.1} parent=5 // pred_check_branch
        %279 = sbr.rel (%p277) target = $region40
      $region39: #{tpu_custom_call.1} parent=5 // pred_region
        // Predicated region
        $region41: #{tpu_custom_call.1} parent=39 // pred_check
          %p280 = pneg %p53
        $region42: #{tpu_custom_call.1} parent=39 // pred_check_branch
          %282 = sbr.rel (%p280) target = $region44
        $region43: #{tpu_custom_call.1} parent=39 // pred_region
          %s283 = sand.u32 %s43, 1
          %s284 = scalar_lea.sflag [#allocation3], %s283
          %s285 = sand.u32 %s43, 1
          %s286 = smul.addr %s285, 144
          %s287 = scalar_lea.vmem [#allocation2], %s286
          %s289 = ssub.s32 2304, 2304
          %290 = vsyncadd %s284, %s289
          %s291 = smul.addr %s28, 36
          %s292 = smul.addr %s291, 64
          %s293 = scalar_lea.hbm %s0, %s292
          %s294 = sshll.u32 %s287, 4
          %s295 = int_to_ptr.vmem [resolvable:$true] %s294
          %300 = dma.hbm_to_vmem [thread:$0]  %s293, 2304, %s295, %s284, 64, 64, 4
        $region44: #{tpu_custom_call.1} parent=39 // pred_fallthru
          _
      $region40: #{tpu_custom_call.1} parent=5 // pred_fallthru
        _
      %p301 = scmp.le.s32.totalorder 1, %s21
      %p302 = scmp.lt.s32.totalorder %s21, 5
      %p303 = pnand %p301, %p302
      %p304 = pneg %p303
      // Predicated region
      $region45: #{tpu_custom_call.1} parent=5 // pred_check
        _
      $region46: #{tpu_custom_call.1} parent=5 // pred_check_branch
        %306 = sbr.rel (%p303) target = $region48
      $region47: #{tpu_custom_call.1} parent=5 // pred_region
        %s307 = ssub.s32 %s21, 1
        %s308 = sand.u32 %s46, 1
        %s309 = scalar_lea.sflag [#allocation3], %s308
        %s310 = sand.u32 %s46, 1
        %s311 = smul.addr %s310, 144
        %s312 = scalar_lea.vmem [#allocation2], %s311
        // Predicated region
        $region49: #{tpu_custom_call.1} parent=47 // pred_check
          %p313 = pneg %p59
        $region50: #{tpu_custom_call.1} parent=47 // pred_check_branch
          %315 = sbr.rel (%p313) target = $region52
        $region51: #{tpu_custom_call.1} parent=47 // pred_region
          %316 = dma.done %s309, 2304
        $region52: #{tpu_custom_call.1} parent=47 // pred_fallthru
          _
        // Predicated region
        $region53: #{tpu_custom_call.1} parent=47 // pred_check
          %p317 = pneg %p80
        $region54: #{tpu_custom_call.1} parent=47 // pred_check_branch
          %319 = sbr.rel (%p317) target = $region56
        $region55: #{tpu_custom_call.1} parent=47 // pred_region
          %320 = dma.done [#allocation6], 1024
        $region56: #{tpu_custom_call.1} parent=47 // pred_fallthru
          _
        // Predicated region
        $region57: #{tpu_custom_call.1} parent=47 // pred_check
          %p321 = pneg %p122
        $region58: #{tpu_custom_call.1} parent=47 // pred_check_branch
          %323 = sbr.rel (%p321) target = $region60
        $region59: #{tpu_custom_call.1} parent=47 // pred_region
          %324 = dma.done [#allocation6], 9216
        $region60: #{tpu_custom_call.1} parent=47 // pred_fallthru
          _
        // Predicated region
        $region61: #{tpu_custom_call.1} parent=47 // pred_check
          %p325 = pneg %p164
        $region62: #{tpu_custom_call.1} parent=47 // pred_check_branch
          %327 = sbr.rel (%p325) target = $region64
        $region63: #{tpu_custom_call.1} parent=47 // pred_region
          %328 = dma.done [#allocation9], 1024
        $region64: #{tpu_custom_call.1} parent=47 // pred_fallthru
          _
        %s329 = sand.u32 %s46, 1
        %s330 = scalar_lea.sflag [#allocation3], %s329
        %s331 = sand.u32 %s46, 1
        %s332 = smul.addr %s331, 144
        %s333 = scalar_lea.vmem [#allocation2], %s332
        %p334 = pneg %p59
        %p335 = pneg %p56
        %p336 = pneg %p80
        %p337 = pneg %p77
        %p338 = pneg %p101
        %p339 = pneg %p98
        %p340 = pneg %p122
        %p341 = pneg %p119
        %p342 = pneg %p143
        %p343 = pneg %p140
        %p344 = pneg %p164
        %p345 = pneg %p161
        %p346 = pneg %p185
        %p347 = pneg %p182
        %p348 = pneg %p213
        %p349 = pneg %p210
        %s350 = sand.u32 %s200, 1
        %s351 = scalar_lea.sflag [#allocation4], %s350
        %s352 = sand.u32 %s200, 1
        %s353 = smul.addr %s352, 128
        %s354 = scalar_lea.vmem [#allocation10], %s353
        %s355 = smul.u32 8, %s31
        %s357 = smul.u32 %s31, 8
        %s358 = smul.u32 %s357, 2
        %s359 = smul.addr %s358, 4
        %s360 = scalar_lea.vmem %s312, %s359 [#allocation2]
        %v361 = vld [vmem:[%s360] sm:$0xf]
        %v362 = vld [vmem:[%s360 + $0x4] sm:$0xf]
        %v363 = vld [vmem:[%s360 + $0x8] sm:$0xf]
        %v364 = vld [vmem:[%s360 + $0xc] sm:$0xf]
        %v365 = vld [vmem:[%s360 + $0x10] sm:$0xf]
        %v366 = vld [vmem:[%s360 + $0x14] sm:$0xf]
        %v367 = vld [vmem:[%s360 + $0x18] sm:$0xf]
        %v368 = vld [vmem:[%s360 + $0x1c] sm:$0xf]
        %v369 = vld [vmem:[%s360 + $0x20] sm:$0xf]
        %v370 = vld [vmem:[%s360 + $0x24] sm:$0xf]
        %v371 = vld [vmem:[%s360 + $0x28] sm:$0xf]
        %v372 = vld [vmem:[%s360 + $0x2c] sm:$0xf]
        %v373 = vld [vmem:[%s360 + $0x30] sm:$0xf]
        %v374 = vld [vmem:[%s360 + $0x34] sm:$0xf]
        %v375 = vld [vmem:[%s360 + $0x38] sm:$0xf]
        %v376 = vld [vmem:[%s360 + $0x3c] sm:$0xf]
        %v377 = vld [vmem:[%s360 + $0x40] sm:$0xf]
        %v378 = vld [vmem:[%s360 + $0x44] sm:$0xf]
        %v379 = vld [vmem:[%s360 + $0x48] sm:$0xf]
        %v380 = vld [vmem:[%s360 + $0x4c] sm:$0xf]
        %v381 = vld [vmem:[#allocation5] sm:$0xf]
        %v382 = vld [vmem:[#allocation5 + $0x4] sm:$0xf]
        %v383 = vld [vmem:[#allocation5 + $0x8] sm:$0xf]
        %v384 = vld [vmem:[#allocation5 + $0xc] sm:$0xf]
        %v385 = vld [vmem:[#allocation5 + $0x10] sm:$0xf]
        %v386 = vld [vmem:[#allocation5 + $0x14] sm:$0xf]
        %v387 = vld [vmem:[#allocation5 + $0x18] sm:$0xf]
        %v388 = vld [vmem:[#allocation5 + $0x1c] sm:$0xf]
        %v389 = vld [vmem:[#allocation5 + $0x20] sm:$0xf]
        %v390 = vld [vmem:[#allocation5 + $0x24] sm:$0xf]
        %v391 = vld [vmem:[#allocation5 + $0x28] sm:$0xf]
        %v392 = vld [vmem:[#allocation5 + $0x2c] sm:$0xf]
        %v393 = vld [vmem:[#allocation5 + $0x30] sm:$0xf]
        %v394 = vld [vmem:[#allocation5 + $0x34] sm:$0xf]
        %v395 = vld [vmem:[#allocation5 + $0x38] sm:$0xf]
        %v396 = vld [vmem:[#allocation5 + $0x3c] sm:$0xf]
        %v397 = vld [vmem:[%s2] sm:$0x1]
        %v399 = vlaneseq
        %v400 = vshrl.u32 %v399, 7
        %v401 = vsub.s32 0, %v400
        %v402 = vrot.slane %v397, %v401
        %v424 = vunpack.c.l.b16 %v361
        %v425 = vunpack.c.l.b16 %v362
        %v426 = vunpack.c.l.b16 %v363
        %v427 = vunpack.c.l.b16 %v364
        %v428 = vunpack.c.l.b16 %v365
        %v429 = vunpack.c.l.b16 %v366
        %v430 = vunpack.c.l.b16 %v367
        %v431 = vunpack.c.l.b16 %v368
        %v432 = vunpack.c.l.b16 %v369
        %v433 = vunpack.c.l.b16 %v370
        %v434 = vunpack.c.l.b16 %v371
        %v435 = vunpack.c.l.b16 %v372
        %v436 = vunpack.c.l.b16 %v373
        %v437 = vunpack.c.l.b16 %v374
        %v438 = vunpack.c.l.b16 %v375
        %v439 = vunpack.c.l.b16 %v376
        %v440 = vunpack.c.l.b16 %v377
        %v441 = vunpack.c.l.b16 %v378
        %v442 = vunpack.c.l.b16 %v379
        %v443 = vunpack.c.l.b16 %v380
        %v444 = vpack.c.b16 %v425, %v424
        %v445 = vpack.c.b16 %v427, %v426
        %v446 = vpack.c.b16 %v429, %v428
        %v447 = vpack.c.b16 %v431, %v430
        %v448 = vpack.c.b16 %v433, %v432
        %v449 = vpack.c.b16 %v435, %v434
        %v450 = vpack.c.b16 %v437, %v436
        %v451 = vpack.c.b16 %v439, %v438
        %v452 = vpack.c.b16 %v441, %v440
        %v453 = vpack.c.b16 %v443, %v442
        %v480 = vunpack.c.l.b16 %v381
        %v481 = vunpack.c.l.b16 %v382
        %v482 = vunpack.c.l.b16 %v383
        %v483 = vunpack.c.l.b16 %v384
        %v484 = vunpack.c.l.b16 %v385
        %v485 = vunpack.c.l.b16 %v386
        %v486 = vunpack.c.l.b16 %v387
        %v487 = vunpack.c.l.b16 %v388
        %v488 = vunpack.c.l.b16 %v389
        %v489 = vunpack.c.l.b16 %v390
        %v490 = vunpack.c.l.b16 %v391
        %v491 = vunpack.c.l.b16 %v392
        %v492 = vunpack.c.l.b16 %v393
        %v493 = vunpack.c.l.b16 %v394
        %v494 = vunpack.c.l.b16 %v395
        %v495 = vunpack.c.l.b16 %v396
        %v496 = vpack.c.b16 %v481, %v480
        %v497 = vpack.c.b16 %v483, %v482
        %v498 = vpack.c.b16 %v485, %v484
        %v499 = vpack.c.b16 %v487, %v486
        %v500 = vpack.c.b16 %v489, %v488
        %v501 = vpack.c.b16 %v491, %v490
        %v502 = vpack.c.b16 %v493, %v492
        %v503 = vpack.c.b16 %v495, %v494
        %512 = vmatprep.subr.bf16.mxu0 0
        %513 = vmatpush1.bf16.msra.mxu0 %v496
        %514 = vmatprep.subr.bf16.mxu0 0
        %515 = vmatpush1.bf16.msra.mxu0 %v497
        %516 = vmatprep.subr.bf16.mxu0 0
        %517 = vmatpush1.bf16.msra.mxu0 %v498
        %518 = vmatprep.subr.bf16.mxu0 0
        %519 = vmatpush1.bf16.msra.mxu0 %v499
        %520 = vmatprep.subr.bf16.mxu0 0
        %521 = vmatpush1.bf16.msra.mxu0 %v500
        %522 = vmatprep.subr.bf16.mxu0 0
        %523 = vmatpush1.bf16.msra.mxu0 %v501
        %524 = vmatprep.subr.bf16.mxu0 0
        %525 = vmatpush1.bf16.msra.mxu0 %v502
        %526 = vmatprep.subr.bf16.mxu0 0
        %527 = vmatpush1.bf16.msra.mxu0 %v503
        %528 = vmatprep.subr.bf16.mxu0 0
        %529 = vmatpush1.bf16.msra.mxu0 0
        %530 = vmatprep.subr.bf16.mxu0 0
        %531 = vmatpush1.bf16.msra.mxu0 0
        %532 = vmatprep.subr.bf16.mxu0 0
        %533 = vmatpush1.bf16.msra.mxu0 0
        %534 = vmatprep.subr.bf16.mxu0 0
        %535 = vmatpush1.bf16.msra.mxu0 0
        %536 = vmatprep.subr.bf16.mxu0 0
        %537 = vmatpush1.bf16.msra.mxu0 0
        %538 = vmatprep.subr.bf16.mxu0 0
        %539 = vmatpush1.bf16.msra.mxu0 0
        %540 = vmatprep.subr.bf16.mxu0 0
        %541 = vmatpush1.bf16.msra.mxu0 0
        %542 = vmatprep.subr.bf16.mxu0 0
        %543 = vmatpush1.bf16.msra.mxu0 0
        %544 = vmatprep.mubr.bf16.mxu0 0
        %545 = vmatmul.mubr.bf16.gmra.mrb[0].mxu0 %v444
        %v546 = vpop.f32.mrb[0].mxu0
        %v547 = vadd.f32 %v402, %v546
        %v548 = vpop.f32.mrb[0].mxu0
        %v549 = vpop.f32.mrb[0].mxu0
        %v550 = vadd.f32 %v402, %v549
        %v551 = vpop.f32.mrb[0].mxu0
        %552 = vmatprep.mubr.bf16.mxu0 0
        %553 = vmatmul.mubr.bf16.gmra.mrb[0].mxu0 %v445
        %v554 = vpop.f32.mrb[0].mxu0
        %v555 = vadd.f32 %v402, %v554
        %v556 = vpop.f32.mrb[0].mxu0
        %v557 = vpop.f32.mrb[0].mxu0
        %v558 = vadd.f32 %v402, %v557
        %v559 = vpop.f32.mrb[0].mxu0
        %560 = vmatprep.mubr.bf16.mxu0 0
        %561 = vmatmul.mubr.bf16.gmra.mrb[0].mxu0 %v446
        %v562 = vpop.f32.mrb[0].mxu0
        %v563 = vadd.f32 %v402, %v562
        %v564 = vpop.f32.mrb[0].mxu0
        %v565 = vpop.f32.mrb[0].mxu0
        %v566 = vadd.f32 %v402, %v565
        %v567 = vpop.f32.mrb[0].mxu0
        %568 = vmatprep.mubr.bf16.mxu0 0
        %569 = vmatmul.mubr.bf16.gmra.mrb[0].mxu0 %v447
        %v570 = vpop.f32.mrb[0].mxu0
        %v571 = vadd.f32 %v402, %v570
        %v572 = vpop.f32.mrb[0].mxu0
        %v573 = vpop.f32.mrb[0].mxu0
        %v574 = vadd.f32 %v402, %v573
        %v575 = vpop.f32.mrb[0].mxu0
        %576 = vmatprep.mubr.bf16.mxu0 0
        %577 = vmatmul.mubr.bf16.gmra.mrb[0].mxu0 %v448
        %v578 = vpop.f32.mrb[0].mxu0
        %v579 = vadd.f32 %v402, %v578
        %v580 = vpop.f32.mrb[0].mxu0
        %v581 = vpop.f32.mrb[0].mxu0
        %v582 = vadd.f32 %v402, %v581
        %v583 = vpop.f32.mrb[0].mxu0
        %584 = vmatprep.mubr.bf16.mxu0 0
        %585 = vmatmul.mubr.bf16.gmra.mrb[0].mxu0 %v449
        %v586 = vpop.f32.mrb[0].mxu0
        %v587 = vadd.f32 %v402, %v586
        %v588 = vpop.f32.mrb[0].mxu0
        %v589 = vpop.f32.mrb[0].mxu0
        %v590 = vadd.f32 %v402, %v589
        %v591 = vpop.f32.mrb[0].mxu0
        %592 = vmatprep.mubr.bf16.mxu0 0
        %593 = vmatmul.mubr.bf16.gmra.mrb[0].mxu0 %v450
        %v594 = vpop.f32.mrb[0].mxu0
        %v595 = vadd.f32 %v402, %v594
        %v596 = vpop.f32.mrb[0].mxu0
        %v597 = vpop.f32.mrb[0].mxu0
        %v598 = vadd.f32 %v402, %v597
        %v599 = vpop.f32.mrb[0].mxu0
        %600 = vmatprep.mubr.bf16.mxu0 0
        %601 = vmatmul.mubr.bf16.gmra.mrb[0].mxu0 %v451
        %v602 = vpop.f32.mrb[0].mxu0
        %v603 = vadd.f32 %v402, %v602
        %v604 = vpop.f32.mrb[0].mxu0
        %v605 = vpop.f32.mrb[0].mxu0
        %v606 = vadd.f32 %v402, %v605
        %v607 = vpop.f32.mrb[0].mxu0
        %608 = vmatprep.mubr.bf16.mxu0 0
        %609 = vmatmul.mubr.bf16.gmra.mrb[0].mxu0 %v452
        %v610 = vpop.f32.mrb[0].mxu0
        %v611 = vadd.f32 %v402, %v610
        %v612 = vpop.f32.mrb[0].mxu0
        %v613 = vpop.f32.mrb[0].mxu0
        %v614 = vadd.f32 %v402, %v613
        %v615 = vpop.f32.mrb[0].mxu0
        %616 = vmatprep.mubr.bf16.mxu0 0
        %617 = vmatmul.mubr.bf16.gmra.mrb[0].mxu0 %v453
        %v618 = vpop.f32.mrb[0].mxu0
        %v619 = vadd.f32 %v402, %v618
        %v620 = vpop.f32.mrb[0].mxu0
        %v621 = vpop.f32.mrb[0].mxu0
        %v622 = vadd.f32 %v402, %v621
        %v623 = vpop.f32.mrb[0].mxu0
        %624 = vdwg.mxu0
        %v625 = vmax.f32 %v547, 0.0
        %v626 = vmax.f32 %v550, 0.0
        %v627 = vmax.f32 %v555, 0.0
        %v628 = vmax.f32 %v558, 0.0
        %v629 = vmax.f32 %v563, 0.0
        %v630 = vmax.f32 %v566, 0.0
        %v631 = vmax.f32 %v571, 0.0
        %v632 = vmax.f32 %v574, 0.0
        %v633 = vmax.f32 %v579, 0.0
        %v634 = vmax.f32 %v582, 0.0
        %v635 = vmax.f32 %v587, 0.0
        %v636 = vmax.f32 %v590, 0.0
        %v637 = vmax.f32 %v595, 0.0
        %v638 = vmax.f32 %v598, 0.0
        %v639 = vmax.f32 %v603, 0.0
        %v640 = vmax.f32 %v606, 0.0
        %v641 = vmax.f32 %v611, 0.0
        %v642 = vmax.f32 %v614, 0.0
        %v643 = vmax.f32 %v619, 0.0
        %v644 = vmax.f32 %v622, 0.0
        %v645 = vstv %s357
        %v646 = vadd.s32 %v645, 1
        %v647 = vadd.s32 %v645, 2
        %v648 = vadd.s32 %v645, 3
        %v649 = vadd.s32 %v645, 4
        %v650 = vadd.s32 %v645, 5
        %v651 = vadd.s32 %v645, 6
        %v652 = vadd.s32 %v645, 7
        %v653 = vadd.s32 %v645, 8
        %v654 = vadd.s32 %v645, 9
        %vm655 = vcmp.ge.s32.totalorder %v645, 1
        %vm656 = vcmp.ge.s32.totalorder %v646, 1
        %vm657 = vcmp.ge.s32.totalorder %v647, 1
        %vm658 = vcmp.ge.s32.totalorder %v648, 1
        %vm659 = vcmp.ge.s32.totalorder %v649, 1
        %vm660 = vcmp.ge.s32.totalorder %v650, 1
        %vm661 = vcmp.ge.s32.totalorder %v651, 1
        %vm662 = vcmp.ge.s32.totalorder %v652, 1
        %vm663 = vcmp.ge.s32.totalorder %v653, 1
        %vm664 = vcmp.ge.s32.totalorder %v654, 1
        %vm665 = vcmp.le.s32.totalorder %v645, 16
        %vm666 = vcmp.le.s32.totalorder %v646, 16
        %vm667 = vcmp.le.s32.totalorder %v647, 16
        %vm668 = vcmp.le.s32.totalorder %v648, 16
        %vm669 = vcmp.le.s32.totalorder %v649, 16
        %vm670 = vcmp.le.s32.totalorder %v650, 16
        %vm671 = vcmp.le.s32.totalorder %v651, 16
        %vm672 = vcmp.le.s32.totalorder %v652, 16
        %vm673 = vcmp.le.s32.totalorder %v653, 16
        %vm674 = vcmp.le.s32.totalorder %v654, 16
        %vm675 = vmand %vm655, %vm665
        %vm676 = vmand %vm656, %vm666
        %vm677 = vmand %vm657, %vm667
        %vm678 = vmand %vm658, %vm668
        %vm679 = vmand %vm659, %vm669
        %vm680 = vmand %vm660, %vm670
        %vm681 = vmand %vm661, %vm671
        %vm682 = vmand %vm662, %vm672
        %vm683 = vmand %vm663, %vm673
        %vm684 = vmand %vm664, %vm674
        %v685 = vsel %vm675, %v625, 0.0
        %v686 = vsel %vm675, %v626, 0.0
        %v687 = vsel %vm676, %v627, 0.0
        %v688 = vsel %vm676, %v628, 0.0
        %v689 = vsel %vm677, %v629, 0.0
        %v690 = vsel %vm677, %v630, 0.0
        %v691 = vsel %vm678, %v631, 0.0
        %v692 = vsel %vm678, %v632, 0.0
        %v693 = vsel %vm679, %v633, 0.0
        %v694 = vsel %vm679, %v634, 0.0
        %v695 = vsel %vm680, %v635, 0.0
        %v696 = vsel %vm680, %v636, 0.0
        %v697 = vsel %vm681, %v637, 0.0
        %v698 = vsel %vm681, %v638, 0.0
        %v699 = vsel %vm682, %v639, 0.0
        %v700 = vsel %vm682, %v640, 0.0
        %v701 = vsel %vm683, %v641, 0.0
        %v702 = vsel %vm683, %v642, 0.0
        %v703 = vsel %vm684, %v643, 0.0
        %v704 = vsel %vm684, %v644, 0.0
        %v705 = vlaneseq
        %v706 = vshrl.u32 %v705, 7
        %v707 = vadd.s32 %v706, 8
        %vm708 = vcmp.ge.s32.totalorder %v706, 1
        %vm709 = vcmp.ge.s32.totalorder %v707, 1
        %vm710 = vcmp.le.s32.totalorder %v706, 14
        %vm711 = vcmp.le.s32.totalorder %v707, 14
        %v712 = vrot.slane %v685, 7
        %v713 = vrot.slane %v686, 7
        %v714 = vrot.slane %v687, 7
        %v715 = vrot.slane %v688, 7
        %v716 = vrot.slane %v689, 7
        %v717 = vrot.slane %v690, 7
        %v718 = vrot.slane %v691, 7
        %v719 = vrot.slane %v692, 7
        %v720 = vrot.slane %v693, 7
        %v721 = vrot.slane %v694, 7
        %v722 = vrot.slane %v695, 7
        %v723 = vrot.slane %v696, 7
        %v724 = vrot.slane %v697, 7
        %v725 = vrot.slane %v698, 7
        %v726 = vrot.slane %v699, 7
        %v727 = vrot.slane %v700, 7
        %vm728 = vcmp.lt.s32.totalorder %v706, 1
        %v729 = vsel %vm728, %v726, %v727
        %v730 = vsel %vm728, %v725, %v726
        %v731 = vsel %vm728, %v724, %v725
        %v732 = vsel %vm728, %v723, %v724
        %v733 = vsel %vm728, %v722, %v723
        %v734 = vsel %vm728, %v721, %v722
        %v735 = vsel %vm728, %v720, %v721
        %v736 = vsel %vm728, %v719, %v720
        %v737 = vsel %vm728, %v718, %v719
        %v738 = vsel %vm728, %v717, %v718
        %v739 = vsel %vm728, %v716, %v717
        %v740 = vsel %vm728, %v715, %v716
        %v741 = vsel %vm728, %v714, %v715
        %v742 = vsel %vm728, %v713, %v714
        %v743 = vsel %vm728, %v712, %v713
        %v744 = vsel %vm728, %v727, %v712
        %v745 = vsel %vm708, %v744, 0.0
        %v746 = vsel %vm709, %v743, 0.0
        %v747 = vsel %vm708, %v742, 0.0
        %v748 = vsel %vm709, %v741, 0.0
        %v749 = vsel %vm708, %v740, 0.0
        %v750 = vsel %vm709, %v739, 0.0
        %v751 = vsel %vm708, %v738, 0.0
        %v752 = vsel %vm709, %v737, 0.0
        %v753 = vsel %vm708, %v736, 0.0
        %v754 = vsel %vm709, %v735, 0.0
        %v755 = vsel %vm708, %v734, 0.0
        %v756 = vsel %vm709, %v733, 0.0
        %v757 = vsel %vm708, %v732, 0.0
        %v758 = vsel %vm709, %v731, 0.0
        %v759 = vsel %vm708, %v730, 0.0
        %v760 = vsel %vm709, %v729, 0.0
        %v761 = vpack.c.bf16 %v746, %v745
        %v762 = vpack.c.bf16 %v748, %v747
        %v763 = vpack.c.bf16 %v750, %v749
        %v764 = vpack.c.bf16 %v752, %v751
        %v765 = vpack.c.bf16 %v754, %v753
        %v766 = vpack.c.bf16 %v756, %v755
        %v767 = vpack.c.bf16 %v758, %v757
        %v768 = vpack.c.bf16 %v760, %v759
        %v769 = vpack.c.bf16 %v686, %v685
        %v770 = vpack.c.bf16 %v688, %v687
        %v771 = vpack.c.bf16 %v690, %v689
        %v772 = vpack.c.bf16 %v692, %v691
        %v773 = vpack.c.bf16 %v694, %v693
        %v774 = vpack.c.bf16 %v696, %v695
        %v775 = vpack.c.bf16 %v698, %v697
        %v776 = vpack.c.bf16 %v700, %v699
        %v777 = vrot.slane %v685, 1
        %v778 = vrot.slane %v686, 1
        %v779 = vrot.slane %v687, 1
        %v780 = vrot.slane %v688, 1
        %v781 = vrot.slane %v689, 1
        %v782 = vrot.slane %v690, 1
        %v783 = vrot.slane %v691, 1
        %v784 = vrot.slane %v692, 1
        %v785 = vrot.slane %v693, 1
        %v786 = vrot.slane %v694, 1
        %v787 = vrot.slane %v695, 1
        %v788 = vrot.slane %v696, 1
        %v789 = vrot.slane %v697, 1
        %v790 = vrot.slane %v698, 1
        %v791 = vrot.slane %v699, 1
        %v792 = vrot.slane %v700, 1
        %vm793 = vcmp.lt.s32.totalorder %v706, 7
        %v794 = vsel %vm793, %v791, %v792
        %v795 = vsel %vm793, %v790, %v791
        %v796 = vsel %vm793, %v789, %v790
        %v797 = vsel %vm793, %v788, %v789
        %v798 = vsel %vm793, %v787, %v788
        %v799 = vsel %vm793, %v786, %v787
        %v800 = vsel %vm793, %v785, %v786
        %v801 = vsel %vm793, %v784, %v785
        %v802 = vsel %vm793, %v783, %v784
        %v803 = vsel %vm793, %v782, %v783
        %v804 = vsel %vm793, %v781, %v782
        %v805 = vsel %vm793, %v780, %v781
        %v806 = vsel %vm793, %v779, %v780
        %v807 = vsel %vm793, %v778, %v779
        %v808 = vsel %vm793, %v777, %v778
        %v809 = vsel %vm793, %v792, %v777
        %v810 = vsel %vm710, %v808, 0.0
        %v811 = vsel %vm711, %v807, 0.0
        %v812 = vsel %vm710, %v806, 0.0
        %v813 = vsel %vm711, %v805, 0.0
        %v814 = vsel %vm710, %v804, 0.0
        %v815 = vsel %vm711, %v803, 0.0
        %v816 = vsel %vm710, %v802, 0.0
        %v817 = vsel %vm711, %v801, 0.0
        %v818 = vsel %vm710, %v800, 0.0
        %v819 = vsel %vm711, %v799, 0.0
        %v820 = vsel %vm710, %v798, 0.0
        %v821 = vsel %vm711, %v797, 0.0
        %v822 = vsel %vm710, %v796, 0.0
        %v823 = vsel %vm711, %v795, 0.0
        %v824 = vsel %vm710, %v794, 0.0
        %v825 = vsel %vm711, %v809, 0.0
        %v826 = vpack.c.bf16 %v811, %v810
        %v827 = vpack.c.bf16 %v813, %v812
        %v828 = vpack.c.bf16 %v815, %v814
        %v829 = vpack.c.bf16 %v817, %v816
        %v830 = vpack.c.bf16 %v819, %v818
        %v831 = vpack.c.bf16 %v821, %v820
        %v832 = vpack.c.bf16 %v823, %v822
        %v833 = vpack.c.bf16 %v825, %v824
        %v834 = vrot.slane %v701, 7
        %v835 = vrot.slane %v702, 7
        %v836 = vsel %vm728, %v834, %v835
        %v837 = vsel %vm728, %v727, %v834
        %v838 = vsel %vm728, %v835, %v714
        %v839 = vsel %vm708, %v838, 0.0
        %v840 = vsel %vm708, %v837, 0.0
        %v841 = vsel %vm709, %v836, 0.0
        %v842 = vpack.c.bf16 %v748, %v839
        %v843 = vpack.c.bf16 %v841, %v840
        %v844 = vpack.c.bf16 %v702, %v701
        %v845 = vrot.slane %v701, 1
        %v846 = vrot.slane %v702, 1
        %v847 = vsel %vm793, %v845, %v846
        %v848 = vsel %vm793, %v792, %v845
        %v849 = vsel %vm793, %v846, %v779
        %v850 = vsel %vm711, %v848, 0.0
        %v851 = vsel %vm710, %v847, 0.0
        %v852 = vsel %vm711, %v849, 0.0
        %v853 = vpack.c.bf16 %v850, %v824
        %v854 = vpack.c.bf16 %v852, %v851
        %v855 = vrot.slane %v703, 7
        %v856 = vrot.slane %v704, 7
        %v857 = vsel %vm728, %v855, %v856
        %v858 = vsel %vm728, %v835, %v855
        %v859 = vsel %vm728, %v856, %v716
        %v860 = vsel %vm708, %v859, 0.0
        %v861 = vsel %vm708, %v858, 0.0
        %v862 = vsel %vm709, %v857, 0.0
        %v863 = vpack.c.bf16 %v750, %v860
        %v864 = vpack.c.bf16 %v862, %v861
        %v865 = vpack.c.bf16 %v704, %v703
        %v866 = vrot.slane %v703, 1
        %v867 = vrot.slane %v704, 1
        %v868 = vsel %vm793, %v866, %v867
        %v869 = vsel %vm793, %v846, %v866
        %v870 = vsel %vm793, %v867, %v781
        %v871 = vsel %vm711, %v869, 0.0
        %v872 = vsel %vm710, %v868, 0.0
        %v873 = vsel %vm711, %v870, 0.0
        %v874 = vpack.c.bf16 %v871, %v851
        %v875 = vpack.c.bf16 %v873, %v872
        %v876 = vld [vmem:[#allocation7] sm:$0xf]
        %v877 = vld [vmem:[#allocation7 + $0x4] sm:$0xf]
        %v878 = vld [vmem:[#allocation7 + $0x8] sm:$0xf]
        %v879 = vld [vmem:[#allocation7 + $0xc] sm:$0xf]
        %v880 = vld [vmem:[#allocation7 + $0x10] sm:$0xf]
        %v881 = vld [vmem:[#allocation7 + $0x14] sm:$0xf]
        %v882 = vld [vmem:[#allocation7 + $0x18] sm:$0xf]
        %v883 = vld [vmem:[#allocation7 + $0x1c] sm:$0xf]
        %v884 = vld [vmem:[#allocation7 + $0x20] sm:$0xf]
        %v885 = vld [vmem:[#allocation7 + $0x24] sm:$0xf]
        %v886 = vld [vmem:[#allocation7 + $0x28] sm:$0xf]
        %v887 = vld [vmem:[#allocation7 + $0x2c] sm:$0xf]
        %v888 = vld [vmem:[#allocation7 + $0x30] sm:$0xf]
        %v889 = vld [vmem:[#allocation7 + $0x34] sm:$0xf]
        %v890 = vld [vmem:[#allocation7 + $0x38] sm:$0xf]
        %v891 = vld [vmem:[#allocation7 + $0x3c] sm:$0xf]
        %v892 = vld [vmem:[#allocation7 + $0x40] sm:$0xf]
        %v893 = vld [vmem:[#allocation7 + $0x44] sm:$0xf]
        %v894 = vld [vmem:[#allocation7 + $0x48] sm:$0xf]
        %v895 = vld [vmem:[#allocation7 + $0x4c] sm:$0xf]
        %v896 = vld [vmem:[#allocation7 + $0x50] sm:$0xf]
        %v897 = vld [vmem:[#allocation7 + $0x54] sm:$0xf]
        %v898 = vld [vmem:[#allocation7 + $0x58] sm:$0xf]
        %v899 = vld [vmem:[#allocation7 + $0x5c] sm:$0xf]
        %v900 = vld [vmem:[#allocation7 + $0x60] sm:$0xf]
        %v901 = vld [vmem:[#allocation7 + $0x64] sm:$0xf]
        %v902 = vld [vmem:[#allocation7 + $0x68] sm:$0xf]
        %v903 = vld [vmem:[#allocation7 + $0x6c] sm:$0xf]
        %v904 = vld [vmem:[#allocation7 + $0x70] sm:$0xf]
        %v905 = vld [vmem:[#allocation7 + $0x74] sm:$0xf]
        %v906 = vld [vmem:[#allocation7 + $0x78] sm:$0xf]
        %v907 = vld [vmem:[#allocation7 + $0x7c] sm:$0xf]
        %v908 = vld [vmem:[#allocation7 + $0x80] sm:$0xf]
        %v909 = vld [vmem:[#allocation7 + $0x84] sm:$0xf]
        %v910 = vld [vmem:[#allocation7 + $0x88] sm:$0xf]
        %v911 = vld [vmem:[#allocation7 + $0x8c] sm:$0xf]
        %v912 = vld [vmem:[#allocation7 + $0x90] sm:$0xf]
        %v913 = vld [vmem:[#allocation7 + $0x94] sm:$0xf]
        %v914 = vld [vmem:[#allocation7 + $0x98] sm:$0xf]
        %v915 = vld [vmem:[#allocation7 + $0x9c] sm:$0xf]
        %v916 = vld [vmem:[#allocation7 + $0xa0] sm:$0xf]
        %v917 = vld [vmem:[#allocation7 + $0xa4] sm:$0xf]
        %v918 = vld [vmem:[#allocation7 + $0xa8] sm:$0xf]
        %v919 = vld [vmem:[#allocation7 + $0xac] sm:$0xf]
        %v920 = vld [vmem:[#allocation7 + $0xb0] sm:$0xf]
        %v921 = vld [vmem:[#allocation7 + $0xb4] sm:$0xf]
        %v922 = vld [vmem:[#allocation7 + $0xb8] sm:$0xf]
        %v923 = vld [vmem:[#allocation7 + $0xbc] sm:$0xf]
        %v924 = vld [vmem:[#allocation7 + $0xc0] sm:$0xf]
        %v925 = vld [vmem:[#allocation7 + $0xc4] sm:$0xf]
        %v926 = vld [vmem:[#allocation7 + $0xc8] sm:$0xf]
        %v927 = vld [vmem:[#allocation7 + $0xcc] sm:$0xf]
        %v928 = vld [vmem:[#allocation7 + $0xd0] sm:$0xf]
        %v929 = vld [vmem:[#allocation7 + $0xd4] sm:$0xf]
        %v930 = vld [vmem:[#allocation7 + $0xd8] sm:$0xf]
        %v931 = vld [vmem:[#allocation7 + $0xdc] sm:$0xf]
        %v932 = vld [vmem:[#allocation7 + $0xe0] sm:$0xf]
        %v933 = vld [vmem:[#allocation7 + $0xe4] sm:$0xf]
        %v934 = vld [vmem:[#allocation7 + $0xe8] sm:$0xf]
        %v935 = vld [vmem:[#allocation7 + $0xec] sm:$0xf]
        %v936 = vld [vmem:[#allocation7 + $0xf0] sm:$0xf]
        %v937 = vld [vmem:[#allocation7 + $0xf4] sm:$0xf]
        %v938 = vld [vmem:[#allocation7 + $0xf8] sm:$0xf]
        %v939 = vld [vmem:[#allocation7 + $0xfc] sm:$0xf]
        %v940 = vld [vmem:[#allocation7 + $0x100] sm:$0xf]
        %v941 = vld [vmem:[#allocation7 + $0x104] sm:$0xf]
        %v942 = vld [vmem:[#allocation7 + $0x108] sm:$0xf]
        %v943 = vld [vmem:[#allocation7 + $0x10c] sm:$0xf]
        %v944 = vld [vmem:[#allocation7 + $0x110] sm:$0xf]
        %v945 = vld [vmem:[#allocation7 + $0x114] sm:$0xf]
        %v946 = vld [vmem:[#allocation7 + $0x118] sm:$0xf]
        %v947 = vld [vmem:[#allocation7 + $0x11c] sm:$0xf]
        %v948 = vld [vmem:[#allocation7 + $0x120] sm:$0xf]
        %v949 = vld [vmem:[#allocation7 + $0x124] sm:$0xf]
        %v950 = vld [vmem:[#allocation7 + $0x128] sm:$0xf]
        %v951 = vld [vmem:[#allocation7 + $0x12c] sm:$0xf]
        %v952 = vld [vmem:[#allocation7 + $0x130] sm:$0xf]
        %v953 = vld [vmem:[#allocation7 + $0x134] sm:$0xf]
        %v954 = vld [vmem:[#allocation7 + $0x138] sm:$0xf]
        %v955 = vld [vmem:[#allocation7 + $0x13c] sm:$0xf]
        %v956 = vld [vmem:[#allocation7 + $0x140] sm:$0xf]
        %v957 = vld [vmem:[#allocation7 + $0x144] sm:$0xf]
        %v958 = vld [vmem:[#allocation7 + $0x148] sm:$0xf]
        %v959 = vld [vmem:[#allocation7 + $0x14c] sm:$0xf]
        %v960 = vld [vmem:[#allocation7 + $0x150] sm:$0xf]
        %v961 = vld [vmem:[#allocation7 + $0x154] sm:$0xf]
        %v962 = vld [vmem:[#allocation7 + $0x158] sm:$0xf]
        %v963 = vld [vmem:[#allocation7 + $0x15c] sm:$0xf]
        %v964 = vld [vmem:[#allocation7 + $0x160] sm:$0xf]
        %v965 = vld [vmem:[#allocation7 + $0x164] sm:$0xf]
        %v966 = vld [vmem:[#allocation7 + $0x168] sm:$0xf]
        %v967 = vld [vmem:[#allocation7 + $0x16c] sm:$0xf]
        %v968 = vld [vmem:[#allocation7 + $0x170] sm:$0xf]
        %v969 = vld [vmem:[#allocation7 + $0x174] sm:$0xf]
        %v970 = vld [vmem:[#allocation7 + $0x178] sm:$0xf]
        %v971 = vld [vmem:[#allocation7 + $0x17c] sm:$0xf]
        %v972 = vld [vmem:[#allocation7 + $0x180] sm:$0xf]
        %v973 = vld [vmem:[#allocation7 + $0x184] sm:$0xf]
        %v974 = vld [vmem:[#allocation7 + $0x188] sm:$0xf]
        %v975 = vld [vmem:[#allocation7 + $0x18c] sm:$0xf]
        %v976 = vld [vmem:[#allocation7 + $0x190] sm:$0xf]
        %v977 = vld [vmem:[#allocation7 + $0x194] sm:$0xf]
        %v978 = vld [vmem:[#allocation7 + $0x198] sm:$0xf]
        %v979 = vld [vmem:[#allocation7 + $0x19c] sm:$0xf]
        %v980 = vld [vmem:[#allocation7 + $0x1a0] sm:$0xf]
        %v981 = vld [vmem:[#allocation7 + $0x1a4] sm:$0xf]
        %v982 = vld [vmem:[#allocation7 + $0x1a8] sm:$0xf]
        %v983 = vld [vmem:[#allocation7 + $0x1ac] sm:$0xf]
        %v984 = vld [vmem:[#allocation7 + $0x1b0] sm:$0xf]
        %v985 = vld [vmem:[#allocation7 + $0x1b4] sm:$0xf]
        %v986 = vld [vmem:[#allocation7 + $0x1b8] sm:$0xf]
        %v987 = vld [vmem:[#allocation7 + $0x1bc] sm:$0xf]
        %v988 = vld [vmem:[#allocation7 + $0x1c0] sm:$0xf]
        %v989 = vld [vmem:[#allocation7 + $0x1c4] sm:$0xf]
        %v990 = vld [vmem:[#allocation7 + $0x1c8] sm:$0xf]
        %v991 = vld [vmem:[#allocation7 + $0x1cc] sm:$0xf]
        %v992 = vld [vmem:[#allocation7 + $0x1d0] sm:$0xf]
        %v993 = vld [vmem:[#allocation7 + $0x1d4] sm:$0xf]
        %v994 = vld [vmem:[#allocation7 + $0x1d8] sm:$0xf]
        %v995 = vld [vmem:[#allocation7 + $0x1dc] sm:$0xf]
        %v996 = vld [vmem:[#allocation7 + $0x1e0] sm:$0xf]
        %v997 = vld [vmem:[#allocation7 + $0x1e4] sm:$0xf]
        %v998 = vld [vmem:[#allocation7 + $0x1e8] sm:$0xf]
        %v999 = vld [vmem:[#allocation7 + $0x1ec] sm:$0xf]
        %v1000 = vld [vmem:[#allocation7 + $0x1f0] sm:$0xf]
        %v1001 = vld [vmem:[#allocation7 + $0x1f4] sm:$0xf]
        %v1002 = vld [vmem:[#allocation7 + $0x1f8] sm:$0xf]
        %v1003 = vld [vmem:[#allocation7 + $0x1fc] sm:$0xf]
        %v1004 = vld [vmem:[#allocation7 + $0x200] sm:$0xf]
        %v1005 = vld [vmem:[#allocation7 + $0x204] sm:$0xf]
        %v1006 = vld [vmem:[#allocation7 + $0x208] sm:$0xf]
        %v1007 = vld [vmem:[#allocation7 + $0x20c] sm:$0xf]
        %v1008 = vld [vmem:[#allocation7 + $0x210] sm:$0xf]
        %v1009 = vld [vmem:[#allocation7 + $0x214] sm:$0xf]
        %v1010 = vld [vmem:[#allocation7 + $0x218] sm:$0xf]
        %v1011 = vld [vmem:[#allocation7 + $0x21c] sm:$0xf]
        %v1012 = vld [vmem:[#allocation7 + $0x220] sm:$0xf]
        %v1013 = vld [vmem:[#allocation7 + $0x224] sm:$0xf]
        %v1014 = vld [vmem:[#allocation7 + $0x228] sm:$0xf]
        %v1015 = vld [vmem:[#allocation7 + $0x22c] sm:$0xf]
        %v1016 = vld [vmem:[#allocation7 + $0x230] sm:$0xf]
        %v1017 = vld [vmem:[#allocation7 + $0x234] sm:$0xf]
        %v1018 = vld [vmem:[#allocation7 + $0x238] sm:$0xf]
        %v1019 = vld [vmem:[#allocation7 + $0x23c] sm:$0xf]
        %v1020 = vld [vmem:[%s4] sm:$0x1]
        %v1022 = vlaneseq
        %v1023 = vshrl.u32 %v1022, 7
        %v1024 = vsub.s32 0, %v1023
        %v1025 = vrot.slane %v1020, %v1024
        %v1171 = vunpack.c.l.b16 %v876
        %v1172 = vunpack.c.l.b16 %v877
        %v1173 = vunpack.c.l.b16 %v878
        %v1174 = vunpack.c.l.b16 %v879
        %v1175 = vunpack.c.l.b16 %v880
        %v1176 = vunpack.c.l.b16 %v881
        %v1177 = vunpack.c.l.b16 %v882
        %v1178 = vunpack.c.l.b16 %v883
        %v1179 = vunpack.c.l.b16 %v884
        %v1180 = vunpack.c.l.b16 %v885
        %v1181 = vunpack.c.l.b16 %v886
        %v1182 = vunpack.c.l.b16 %v887
        %v1183 = vunpack.c.l.b16 %v888
        %v1184 = vunpack.c.l.b16 %v889
        %v1185 = vunpack.c.l.b16 %v890
        %v1186 = vunpack.c.l.b16 %v891
        %v1187 = vunpack.c.l.b16 %v892
        %v1188 = vunpack.c.l.b16 %v893
        %v1189 = vunpack.c.l.b16 %v894
        %v1190 = vunpack.c.l.b16 %v895
        %v1191 = vunpack.c.l.b16 %v896
        %v1192 = vunpack.c.l.b16 %v897
        %v1193 = vunpack.c.l.b16 %v898
        %v1194 = vunpack.c.l.b16 %v899
        %v1195 = vunpack.c.l.b16 %v900
        %v1196 = vunpack.c.l.b16 %v901
        %v1197 = vunpack.c.l.b16 %v902
        %v1198 = vunpack.c.l.b16 %v903
        %v1199 = vunpack.c.l.b16 %v904
        %v1200 = vunpack.c.l.b16 %v905
        %v1201 = vunpack.c.l.b16 %v906
        %v1202 = vunpack.c.l.b16 %v907
        %v1203 = vunpack.c.l.b16 %v908
        %v1204 = vunpack.c.l.b16 %v909
        %v1205 = vunpack.c.l.b16 %v910
        %v1206 = vunpack.c.l.b16 %v911
        %v1207 = vunpack.c.l.b16 %v912
        %v1208 = vunpack.c.l.b16 %v913
        %v1209 = vunpack.c.l.b16 %v914
        %v1210 = vunpack.c.l.b16 %v915
        %v1211 = vunpack.c.l.b16 %v916
        %v1212 = vunpack.c.l.b16 %v917
        %v1213 = vunpack.c.l.b16 %v918
        %v1214 = vunpack.c.l.b16 %v919
        %v1215 = vunpack.c.l.b16 %v920
        %v1216 = vunpack.c.l.b16 %v921
        %v1217 = vunpack.c.l.b16 %v922
        %v1218 = vunpack.c.l.b16 %v923
        %v1219 = vunpack.c.l.b16 %v924
        %v1220 = vunpack.c.l.b16 %v925
        %v1221 = vunpack.c.l.b16 %v926
        %v1222 = vunpack.c.l.b16 %v927
        %v1223 = vunpack.c.l.b16 %v928
        %v1224 = vunpack.c.l.b16 %v929
        %v1225 = vunpack.c.l.b16 %v930
        %v1226 = vunpack.c.l.b16 %v931
        %v1227 = vunpack.c.l.b16 %v932
        %v1228 = vunpack.c.l.b16 %v933
        %v1229 = vunpack.c.l.b16 %v934
        %v1230 = vunpack.c.l.b16 %v935
        %v1231 = vunpack.c.l.b16 %v936
        %v1232 = vunpack.c.l.b16 %v937
        %v1233 = vunpack.c.l.b16 %v938
        %v1234 = vunpack.c.l.b16 %v939
        %v1235 = vunpack.c.l.b16 %v940
        %v1236 = vunpack.c.l.b16 %v941
        %v1237 = vunpack.c.l.b16 %v942
        %v1238 = vunpack.c.l.b16 %v943
        %v1239 = vunpack.c.l.b16 %v944
        %v1240 = vunpack.c.l.b16 %v945
        %v1241 = vunpack.c.l.b16 %v946
        %v1242 = vunpack.c.l.b16 %v947
        %v1243 = vunpack.c.l.b16 %v948
        %v1244 = vunpack.c.l.b16 %v949
        %v1245 = vunpack.c.l.b16 %v950
        %v1246 = vunpack.c.l.b16 %v951
        %v1247 = vunpack.c.l.b16 %v952
        %v1248 = vunpack.c.l.b16 %v953
        %v1249 = vunpack.c.l.b16 %v954
        %v1250 = vunpack.c.l.b16 %v955
        %v1251 = vunpack.c.l.b16 %v956
        %v1252 = vunpack.c.l.b16 %v957
        %v1253 = vunpack.c.l.b16 %v958
        %v1254 = vunpack.c.l.b16 %v959
        %v1255 = vunpack.c.l.b16 %v960
        %v1256 = vunpack.c.l.b16 %v961
        %v1257 = vunpack.c.l.b16 %v962
        %v1258 = vunpack.c.l.b16 %v963
        %v1259 = vunpack.c.l.b16 %v964
        %v1260 = vunpack.c.l.b16 %v965
        %v1261 = vunpack.c.l.b16 %v966
        %v1262 = vunpack.c.l.b16 %v967
        %v1263 = vunpack.c.l.b16 %v968
        %v1264 = vunpack.c.l.b16 %v969
        %v1265 = vunpack.c.l.b16 %v970
        %v1266 = vunpack.c.l.b16 %v971
        %v1267 = vunpack.c.l.b16 %v972
        %v1268 = vunpack.c.l.b16 %v973
        %v1269 = vunpack.c.l.b16 %v974
        %v1270 = vunpack.c.l.b16 %v975
        %v1271 = vunpack.c.l.b16 %v976
        %v1272 = vunpack.c.l.b16 %v977
        %v1273 = vunpack.c.l.b16 %v978
        %v1274 = vunpack.c.l.b16 %v979
        %v1275 = vunpack.c.l.b16 %v980
        %v1276 = vunpack.c.l.b16 %v981
        %v1277 = vunpack.c.l.b16 %v982
        %v1278 = vunpack.c.l.b16 %v983
        %v1279 = vunpack.c.l.b16 %v984
        %v1280 = vunpack.c.l.b16 %v985
        %v1281 = vunpack.c.l.b16 %v986
        %v1282 = vunpack.c.l.b16 %v987
        %v1283 = vunpack.c.l.b16 %v988
        %v1284 = vunpack.c.l.b16 %v989
        %v1285 = vunpack.c.l.b16 %v990
        %v1286 = vunpack.c.l.b16 %v991
        %v1287 = vunpack.c.l.b16 %v992
        %v1288 = vunpack.c.l.b16 %v993
        %v1289 = vunpack.c.l.b16 %v994
        %v1290 = vunpack.c.l.b16 %v995
        %v1291 = vunpack.c.l.b16 %v996
        %v1292 = vunpack.c.l.b16 %v997
        %v1293 = vunpack.c.l.b16 %v998
        %v1294 = vunpack.c.l.b16 %v999
        %v1295 = vunpack.c.l.b16 %v1000
        %v1296 = vunpack.c.l.b16 %v1001
        %v1297 = vunpack.c.l.b16 %v1002
        %v1298 = vunpack.c.l.b16 %v1003
        %v1299 = vunpack.c.l.b16 %v1004
        %v1300 = vunpack.c.l.b16 %v1005
        %v1301 = vunpack.c.l.b16 %v1006
        %v1302 = vunpack.c.l.b16 %v1007
        %v1303 = vunpack.c.l.b16 %v1008
        %v1304 = vunpack.c.l.b16 %v1009
        %v1305 = vunpack.c.l.b16 %v1010
        %v1306 = vunpack.c.l.b16 %v1011
        %v1307 = vunpack.c.l.b16 %v1012
        %v1308 = vunpack.c.l.b16 %v1013
        %v1309 = vunpack.c.l.b16 %v1014
        %v1310 = vunpack.c.l.b16 %v1015
        %v1311 = vunpack.c.l.b16 %v1016
        %v1312 = vunpack.c.l.b16 %v1017
        %v1313 = vunpack.c.l.b16 %v1018
        %v1314 = vunpack.c.l.b16 %v1019
        %v1315 = vpack.c.b16 %v1172, %v1171
        %v1316 = vpack.c.b16 %v1174, %v1173
        %v1317 = vpack.c.b16 %v1176, %v1175
        %v1318 = vpack.c.b16 %v1178, %v1177
        %v1319 = vpack.c.b16 %v1180, %v1179
        %v1320 = vpack.c.b16 %v1182, %v1181
        %v1321 = vpack.c.b16 %v1184, %v1183
        %v1322 = vpack.c.b16 %v1186, %v1185
        %v1323 = vpack.c.b16 %v1188, %v1187
        %v1324 = vpack.c.b16 %v1190, %v1189
        %v1325 = vpack.c.b16 %v1192, %v1191
        %v1326 = vpack.c.b16 %v1194, %v1193
        %v1327 = vpack.c.b16 %v1196, %v1195
        %v1328 = vpack.c.b16 %v1198, %v1197
        %v1329 = vpack.c.b16 %v1200, %v1199
        %v1330 = vpack.c.b16 %v1202, %v1201
        %v1331 = vpack.c.b16 %v1204, %v1203
        %v1332 = vpack.c.b16 %v1206, %v1205
        %v1333 = vpack.c.b16 %v1208, %v1207
        %v1334 = vpack.c.b16 %v1210, %v1209
        %v1335 = vpack.c.b16 %v1212, %v1211
        %v1336 = vpack.c.b16 %v1214, %v1213
        %v1337 = vpack.c.b16 %v1216, %v1215
        %v1338 = vpack.c.b16 %v1218, %v1217
        %v1339 = vpack.c.b16 %v1220, %v1219
        %v1340 = vpack.c.b16 %v1222, %v1221
        %v1341 = vpack.c.b16 %v1224, %v1223
        %v1342 = vpack.c.b16 %v1226, %v1225
        %v1343 = vpack.c.b16 %v1228, %v1227
        %v1344 = vpack.c.b16 %v1230, %v1229
        %v1345 = vpack.c.b16 %v1232, %v1231
        %v1346 = vpack.c.b16 %v1234, %v1233
        %v1347 = vpack.c.b16 %v1236, %v1235
        %v1348 = vpack.c.b16 %v1238, %v1237
        %v1349 = vpack.c.b16 %v1240, %v1239
        %v1350 = vpack.c.b16 %v1242, %v1241
        %v1351 = vpack.c.b16 %v1244, %v1243
        %v1352 = vpack.c.b16 %v1246, %v1245
        %v1353 = vpack.c.b16 %v1248, %v1247
        %v1354 = vpack.c.b16 %v1250, %v1249
        %v1355 = vpack.c.b16 %v1252, %v1251
        %v1356 = vpack.c.b16 %v1254, %v1253
        %v1357 = vpack.c.b16 %v1256, %v1255
        %v1358 = vpack.c.b16 %v1258, %v1257
        %v1359 = vpack.c.b16 %v1260, %v1259
        %v1360 = vpack.c.b16 %v1262, %v1261
        %v1361 = vpack.c.b16 %v1264, %v1263
        %v1362 = vpack.c.b16 %v1266, %v1265
        %v1363 = vpack.c.b16 %v1268, %v1267
        %v1364 = vpack.c.b16 %v1270, %v1269
        %v1365 = vpack.c.b16 %v1272, %v1271
        %v1366 = vpack.c.b16 %v1274, %v1273
        %v1367 = vpack.c.b16 %v1276, %v1275
        %v1368 = vpack.c.b16 %v1278, %v1277
        %v1369 = vpack.c.b16 %v1280, %v1279
        %v1370 = vpack.c.b16 %v1282, %v1281
        %v1371 = vpack.c.b16 %v1284, %v1283
        %v1372 = vpack.c.b16 %v1286, %v1285
        %v1373 = vpack.c.b16 %v1288, %v1287
        %v1374 = vpack.c.b16 %v1290, %v1289
        %v1375 = vpack.c.b16 %v1292, %v1291
        %v1376 = vpack.c.b16 %v1294, %v1293
        %v1377 = vpack.c.b16 %v1296, %v1295
        %v1378 = vpack.c.b16 %v1298, %v1297
        %v1379 = vpack.c.b16 %v1300, %v1299
        %v1380 = vpack.c.b16 %v1302, %v1301
        %v1381 = vpack.c.b16 %v1304, %v1303
        %v1382 = vpack.c.b16 %v1306, %v1305
        %v1383 = vpack.c.b16 %v1308, %v1307
        %v1384 = vpack.c.b16 %v1310, %v1309
        %v1385 = vpack.c.b16 %v1312, %v1311
        %v1386 = vpack.c.b16 %v1314, %v1313
        %1459 = vmatprep.subr.bf16.mxu0 0
        %1460 = vmatpush1.bf16.msra.mxu0 %v1315
        %1461 = vmatprep.subr.bf16.mxu0 0
        %1462 = vmatpush1.bf16.msra.mxu0 %v1316
        %1463 = vmatprep.subr.bf16.mxu0 0
        %1464 = vmatpush1.bf16.msra.mxu0 %v1317
        %1465 = vmatprep.subr.bf16.mxu0 0
        %1466 = vmatpush1.bf16.msra.mxu0 %v1318
        %1467 = vmatprep.subr.bf16.mxu0 0
        %1468 = vmatpush1.bf16.msra.mxu0 %v1319
        %1469 = vmatprep.subr.bf16.mxu0 0
        %1470 = vmatpush1.bf16.msra.mxu0 %v1320
        %1471 = vmatprep.subr.bf16.mxu0 0
        %1472 = vmatpush1.bf16.msra.mxu0 %v1321
        %1473 = vmatprep.subr.bf16.mxu0 0
        %1474 = vmatpush1.bf16.msra.mxu0 %v1322
        %1475 = vmatprep.subr.bf16.mxu0 0
        %1476 = vmatpush1.bf16.msra.mxu0 %v1323
        %1477 = vmatprep.subr.bf16.mxu0 0
        %1478 = vmatpush1.bf16.msra.mxu0 %v1324
        %1479 = vmatprep.subr.bf16.mxu0 0
        %1480 = vmatpush1.bf16.msra.mxu0 %v1325
        %1481 = vmatprep.subr.bf16.mxu0 0
        %1482 = vmatpush1.bf16.msra.mxu0 %v1326
        %1483 = vmatprep.subr.bf16.mxu0 0
        %1484 = vmatpush1.bf16.msra.mxu0 %v1327
        %1485 = vmatprep.subr.bf16.mxu0 0
        %1486 = vmatpush1.bf16.msra.mxu0 %v1328
        %1487 = vmatprep.subr.bf16.mxu0 0
        %1488 = vmatpush1.bf16.msra.mxu0 %v1329
        %1489 = vmatprep.subr.bf16.mxu0 0
        %1490 = vmatpush1.bf16.msra.mxu0 %v1330
        %1491 = vmatprep.mubr.bf16.mxu0 %v769
        %1492 = vmatmul.mubr.bf16.gmra.mrb[0].mxu0 %v761
        %v1493 = vpop.f32.mrb[0].mxu0
        %v1494 = vadd.f32 %v1025, %v1493
        %v1495 = vpop.f32.mrb[0].mxu0
        %v1496 = vpop.f32.mrb[0].mxu0
        %v1497 = vadd.f32 %v1025, %v1496
        %v1498 = vpop.f32.mrb[0].mxu0
        %1499 = vmatprep.mubr.bf16.mxu0 %v770
        %1500 = vmatmul.mubr.bf16.gmra.mrb[0].mxu0 %v762
        %v1501 = vpop.f32.mrb[0].mxu0
        %v1502 = vadd.f32 %v1025, %v1501
        %v1503 = vpop.f32.mrb[0].mxu0
        %v1504 = vpop.f32.mrb[0].mxu0
        %v1505 = vadd.f32 %v1025, %v1504
        %v1506 = vpop.f32.mrb[0].mxu0
        %1507 = vmatprep.mubr.bf16.mxu0 %v771
        %1508 = vmatmul.mubr.bf16.gmra.mrb[0].mxu0 %v763
        %v1509 = vpop.f32.mrb[0].mxu0
        %v1510 = vadd.f32 %v1025, %v1509
        %v1511 = vpop.f32.mrb[0].mxu0
        %v1512 = vpop.f32.mrb[0].mxu0
        %v1513 = vadd.f32 %v1025, %v1512
        %v1514 = vpop.f32.mrb[0].mxu0
        %1515 = vmatprep.mubr.bf16.mxu0 %v772
        %1516 = vmatmul.mubr.bf16.gmra.mrb[0].mxu0 %v764
        %v1517 = vpop.f32.mrb[0].mxu0
        %v1518 = vadd.f32 %v1025, %v1517
        %v1519 = vpop.f32.mrb[0].mxu0
        %v1520 = vpop.f32.mrb[0].mxu0
        %v1521 = vadd.f32 %v1025, %v1520
        %v1522 = vpop.f32.mrb[0].mxu0
        %1523 = vmatprep.mubr.bf16.mxu0 %v773
        %1524 = vmatmul.mubr.bf16.gmra.mrb[0].mxu0 %v765
        %v1525 = vpop.f32.mrb[0].mxu0
        %v1526 = vadd.f32 %v1025, %v1525
        %v1527 = vpop.f32.mrb[0].mxu0
        %v1528 = vpop.f32.mrb[0].mxu0
        %v1529 = vadd.f32 %v1025, %v1528
        %v1530 = vpop.f32.mrb[0].mxu0
        %1531 = vmatprep.mubr.bf16.mxu0 %v774
        %1532 = vmatmul.mubr.bf16.gmra.mrb[0].mxu0 %v766
        %v1533 = vpop.f32.mrb[0].mxu0
        %v1534 = vadd.f32 %v1025, %v1533
        %v1535 = vpop.f32.mrb[0].mxu0
        %v1536 = vpop.f32.mrb[0].mxu0
        %v1537 = vadd.f32 %v1025, %v1536
        %v1538 = vpop.f32.mrb[0].mxu0
        %1539 = vmatprep.mubr.bf16.mxu0 %v775
        %1540 = vmatmul.mubr.bf16.gmra.mrb[0].mxu0 %v767
        %v1541 = vpop.f32.mrb[0].mxu0
        %v1542 = vadd.f32 %v1025, %v1541
        %v1543 = vpop.f32.mrb[0].mxu0
        %v1544 = vpop.f32.mrb[0].mxu0
        %v1545 = vadd.f32 %v1025, %v1544
        %v1546 = vpop.f32.mrb[0].mxu0
        %1547 = vmatprep.mubr.bf16.mxu0 %v776
        %1548 = vmatmul.mubr.bf16.gmra.mrb[0].mxu0 %v768
        %v1549 = vpop.f32.mrb[0].mxu0
        %v1550 = vadd.f32 %v1025, %v1549
        %v1551 = vpop.f32.mrb[0].mxu0
        %v1552 = vpop.f32.mrb[0].mxu0
        %v1553 = vadd.f32 %v1025, %v1552
        %v1554 = vpop.f32.mrb[0].mxu0
        %1555 = vdwg.mxu0
        %1556 = vmatprep.subr.bf16.mxu0 0
        %1557 = vmatpush1.bf16.msra.mxu0 %v1331
        %1558 = vmatprep.subr.bf16.mxu0 0
        %1559 = vmatpush1.bf16.msra.mxu0 %v1332
        %1560 = vmatprep.subr.bf16.mxu0 0
        %1561 = vmatpush1.bf16.msra.mxu0 %v1333
        %1562 = vmatprep.subr.bf16.mxu0 0
        %1563 = vmatpush1.bf16.msra.mxu0 %v1334
        %1564 = vmatprep.subr.bf16.mxu0 0
        %1565 = vmatpush1.bf16.msra.mxu0 %v1335
        %1566 = vmatprep.subr.bf16.mxu0 0
        %1567 = vmatpush1.bf16.msra.mxu0 %v1336
        %1568 = vmatprep.subr.bf16.mxu0 0
        %1569 = vmatpush1.bf16.msra.mxu0 %v1337
        %1570 = vmatprep.subr.bf16.mxu0 0
        %1571 = vmatpush1.bf16.msra.mxu0 %v1338
        %1572 = vmatprep.subr.bf16.mxu0 0
        %1573 = vmatpush1.bf16.msra.mxu0 %v1339
        %1574 = vmatprep.subr.bf16.mxu0 0
        %1575 = vmatpush1.bf16.msra.mxu0 %v1340
        %1576 = vmatprep.subr.bf16.mxu0 0
        %1577 = vmatpush1.bf16.msra.mxu0 %v1341
        %1578 = vmatprep.subr.bf16.mxu0 0
        %1579 = vmatpush1.bf16.msra.mxu0 %v1342
        %1580 = vmatprep.subr.bf16.mxu0 0
        %1581 = vmatpush1.bf16.msra.mxu0 %v1343
        %1582 = vmatprep.subr.bf16.mxu0 0
        %1583 = vmatpush1.bf16.msra.mxu0 %v1344
        %1584 = vmatprep.subr.bf16.mxu0 0
        %1585 = vmatpush1.bf16.msra.mxu0 %v1345
        %1586 = vmatprep.subr.bf16.mxu0 0
        %1587 = vmatpush1.bf16.msra.mxu0 %v1346
        %1588 = vmatprep.mubr.bf16.mxu0 %v842
        %1589 = vmatmul.mubr.bf16.gmra.mrb[0].mxu0 %v826
        %v1590 = vpop.f32.mrb[0].mxu0
        %v1591 = vadd.f32 %v1494, %v1590
        %v1592 = vpop.f32.mrb[0].mxu0
        %v1593 = vpop.f32.mrb[0].mxu0
        %v1594 = vadd.f32 %v1497, %v1593
        %v1595 = vpop.f32.mrb[0].mxu0
        %1596 = vmatprep.mubr.bf16.mxu0 %v763
        %1597 = vmatmul.mubr.bf16.gmra.mrb[0].mxu0 %v827
        %v1598 = vpop.f32.mrb[0].mxu0
        %v1599 = vadd.f32 %v1502, %v1598
        %v1600 = vpop.f32.mrb[0].mxu0
        %v1601 = vpop.f32.mrb[0].mxu0
        %v1602 = vadd.f32 %v1505, %v1601
        %v1603 = vpop.f32.mrb[0].mxu0
        %1604 = vmatprep.mubr.bf16.mxu0 %v764
        %1605 = vmatmul.mubr.bf16.gmra.mrb[0].mxu0 %v828
        %v1606 = vpop.f32.mrb[0].mxu0
        %v1607 = vadd.f32 %v1510, %v1606
        %v1608 = vpop.f32.mrb[0].mxu0
        %v1609 = vpop.f32.mrb[0].mxu0
        %v1610 = vadd.f32 %v1513, %v1609
        %v1611 = vpop.f32.mrb[0].mxu0
        %1612 = vmatprep.mubr.bf16.mxu0 %v765
        %1613 = vmatmul.mubr.bf16.gmra.mrb[0].mxu0 %v829
        %v1614 = vpop.f32.mrb[0].mxu0
        %v1615 = vadd.f32 %v1518, %v1614
        %v1616 = vpop.f32.mrb[0].mxu0
        %v1617 = vpop.f32.mrb[0].mxu0
        %v1618 = vadd.f32 %v1521, %v1617
        %v1619 = vpop.f32.mrb[0].mxu0
        %1620 = vmatprep.mubr.bf16.mxu0 %v766
        %1621 = vmatmul.mubr.bf16.gmra.mrb[0].mxu0 %v830
        %v1622 = vpop.f32.mrb[0].mxu0
        %v1623 = vadd.f32 %v1526, %v1622
        %v1624 = vpop.f32.mrb[0].mxu0
        %v1625 = vpop.f32.mrb[0].mxu0
        %v1626 = vadd.f32 %v1529, %v1625
        %v1627 = vpop.f32.mrb[0].mxu0
        %1628 = vmatprep.mubr.bf16.mxu0 %v767
        %1629 = vmatmul.mubr.bf16.gmra.mrb[0].mxu0 %v831
        %v1630 = vpop.f32.mrb[0].mxu0
        %v1631 = vadd.f32 %v1534, %v1630
        %v1632 = vpop.f32.mrb[0].mxu0
        %v1633 = vpop.f32.mrb[0].mxu0
        %v1634 = vadd.f32 %v1537, %v1633
        %v1635 = vpop.f32.mrb[0].mxu0
        %1636 = vmatprep.mubr.bf16.mxu0 %v768
        %1637 = vmatmul.mubr.bf16.gmra.mrb[0].mxu0 %v832
        %v1638 = vpop.f32.mrb[0].mxu0
        %v1639 = vadd.f32 %v1542, %v1638
        %v1640 = vpop.f32.mrb[0].mxu0
        %v1641 = vpop.f32.mrb[0].mxu0
        %v1642 = vadd.f32 %v1545, %v1641
        %v1643 = vpop.f32.mrb[0].mxu0
        %1644 = vmatprep.mubr.bf16.mxu0 %v843
        %1645 = vmatmul.mubr.bf16.gmra.mrb[0].mxu0 %v833
        %v1646 = vpop.f32.mrb[0].mxu0
        %v1647 = vadd.f32 %v1550, %v1646
        %v1648 = vpop.f32.mrb[0].mxu0
        %v1649 = vpop.f32.mrb[0].mxu0
        %v1650 = vadd.f32 %v1553, %v1649
        %v1651 = vpop.f32.mrb[0].mxu0
        %1652 = vdwg.mxu0
        %1653 = vmatprep.subr.bf16.mxu0 0
        %1654 = vmatpush1.bf16.msra.mxu0 %v1347
        %1655 = vmatprep.subr.bf16.mxu0 0
        %1656 = vmatpush1.bf16.msra.mxu0 %v1348
        %1657 = vmatprep.subr.bf16.mxu0 0
        %1658 = vmatpush1.bf16.msra.mxu0 %v1349
        %1659 = vmatprep.subr.bf16.mxu0 0
        %1660 = vmatpush1.bf16.msra.mxu0 %v1350
        %1661 = vmatprep.subr.bf16.mxu0 0
        %1662 = vmatpush1.bf16.msra.mxu0 %v1351
        %1663 = vmatprep.subr.bf16.mxu0 0
        %1664 = vmatpush1.bf16.msra.mxu0 %v1352
        %1665 = vmatprep.subr.bf16.mxu0 0
        %1666 = vmatpush1.bf16.msra.mxu0 %v1353
        %1667 = vmatprep.subr.bf16.mxu0 0
        %1668 = vmatpush1.bf16.msra.mxu0 %v1354
        %1669 = vmatprep.subr.bf16.mxu0 0
        %1670 = vmatpush1.bf16.msra.mxu0 %v1355
        %1671 = vmatprep.subr.bf16.mxu0 0
        %1672 = vmatpush1.bf16.msra.mxu0 %v1356
        %1673 = vmatprep.subr.bf16.mxu0 0
        %1674 = vmatpush1.bf16.msra.mxu0 %v1357
        %1675 = vmatprep.subr.bf16.mxu0 0
        %1676 = vmatpush1.bf16.msra.mxu0 %v1358
        %1677 = vmatprep.subr.bf16.mxu0 0
        %1678 = vmatpush1.bf16.msra.mxu0 %v1359
        %1679 = vmatprep.subr.bf16.mxu0 0
        %1680 = vmatpush1.bf16.msra.mxu0 %v1360
        %1681 = vmatprep.subr.bf16.mxu0 0
        %1682 = vmatpush1.bf16.msra.mxu0 %v1361
        %1683 = vmatprep.subr.bf16.mxu0 0
        %1684 = vmatpush1.bf16.msra.mxu0 %v1362
        %1685 = vmatprep.mubr.bf16.mxu0 %v827
        %1686 = vmatmul.mubr.bf16.gmra.mrb[0].mxu0 %v770
        %v1687 = vpop.f32.mrb[0].mxu0
        %v1688 = vadd.f32 %v1591, %v1687
        %v1689 = vpop.f32.mrb[0].mxu0
        %v1690 = vpop.f32.mrb[0].mxu0
        %v1691 = vadd.f32 %v1594, %v1690
        %v1692 = vpop.f32.mrb[0].mxu0
        %1693 = vmatprep.mubr.bf16.mxu0 %v828
        %1694 = vmatmul.mubr.bf16.gmra.mrb[0].mxu0 %v771
        %v1695 = vpop.f32.mrb[0].mxu0
        %v1696 = vadd.f32 %v1599, %v1695
        %v1697 = vpop.f32.mrb[0].mxu0
        %v1698 = vpop.f32.mrb[0].mxu0
        %v1699 = vadd.f32 %v1602, %v1698
        %v1700 = vpop.f32.mrb[0].mxu0
        %1701 = vmatprep.mubr.bf16.mxu0 %v829
        %1702 = vmatmul.mubr.bf16.gmra.mrb[0].mxu0 %v772
        %v1703 = vpop.f32.mrb[0].mxu0
        %v1704 = vadd.f32 %v1607, %v1703
        %v1705 = vpop.f32.mrb[0].mxu0
        %v1706 = vpop.f32.mrb[0].mxu0
        %v1707 = vadd.f32 %v1610, %v1706
        %v1708 = vpop.f32.mrb[0].mxu0
        %1709 = vmatprep.mubr.bf16.mxu0 %v830
        %1710 = vmatmul.mubr.bf16.gmra.mrb[0].mxu0 %v773
        %v1711 = vpop.f32.mrb[0].mxu0
        %v1712 = vadd.f32 %v1615, %v1711
        %v1713 = vpop.f32.mrb[0].mxu0
        %v1714 = vpop.f32.mrb[0].mxu0
        %v1715 = vadd.f32 %v1618, %v1714
        %v1716 = vpop.f32.mrb[0].mxu0
        %1717 = vmatprep.mubr.bf16.mxu0 %v831
        %1718 = vmatmul.mubr.bf16.gmra.mrb[0].mxu0 %v774
        %v1719 = vpop.f32.mrb[0].mxu0
        %v1720 = vadd.f32 %v1623, %v1719
        %v1721 = vpop.f32.mrb[0].mxu0
        %v1722 = vpop.f32.mrb[0].mxu0
        %v1723 = vadd.f32 %v1626, %v1722
        %v1724 = vpop.f32.mrb[0].mxu0
        %1725 = vmatprep.mubr.bf16.mxu0 %v832
        %1726 = vmatmul.mubr.bf16.gmra.mrb[0].mxu0 %v775
        %v1727 = vpop.f32.mrb[0].mxu0
        %v1728 = vadd.f32 %v1631, %v1727
        %v1729 = vpop.f32.mrb[0].mxu0
        %v1730 = vpop.f32.mrb[0].mxu0
        %v1731 = vadd.f32 %v1634, %v1730
        %v1732 = vpop.f32.mrb[0].mxu0
        %1733 = vmatprep.mubr.bf16.mxu0 %v853
        %1734 = vmatmul.mubr.bf16.gmra.mrb[0].mxu0 %v776
        %v1735 = vpop.f32.mrb[0].mxu0
        %v1736 = vadd.f32 %v1639, %v1735
        %v1737 = vpop.f32.mrb[0].mxu0
        %v1738 = vpop.f32.mrb[0].mxu0
        %v1739 = vadd.f32 %v1642, %v1738
        %v1740 = vpop.f32.mrb[0].mxu0
        %1741 = vmatprep.mubr.bf16.mxu0 %v854
        %1742 = vmatmul.mubr.bf16.gmra.mrb[0].mxu0 %v844
        %v1743 = vpop.f32.mrb[0].mxu0
        %v1744 = vadd.f32 %v1647, %v1743
        %v1745 = vpop.f32.mrb[0].mxu0
        %v1746 = vpop.f32.mrb[0].mxu0
        %v1747 = vadd.f32 %v1650, %v1746
        %v1748 = vpop.f32.mrb[0].mxu0
        %1749 = vdwg.mxu0
        %1750 = vmatprep.subr.bf16.mxu0 0
        %1751 = vmatpush1.bf16.msra.mxu0 %v1363
        %1752 = vmatprep.subr.bf16.mxu0 0
        %1753 = vmatpush1.bf16.msra.mxu0 %v1364
        %1754 = vmatprep.subr.bf16.mxu0 0
        %1755 = vmatpush1.bf16.msra.mxu0 %v1365
        %1756 = vmatprep.subr.bf16.mxu0 0
        %1757 = vmatpush1.bf16.msra.mxu0 %v1366
        %1758 = vmatprep.subr.bf16.mxu0 0
        %1759 = vmatpush1.bf16.msra.mxu0 %v1367
        %1760 = vmatprep.subr.bf16.mxu0 0
        %1761 = vmatpush1.bf16.msra.mxu0 %v1368
        %1762 = vmatprep.subr.bf16.mxu0 0
        %1763 = vmatpush1.bf16.msra.mxu0 %v1369
        %1764 = vmatprep.subr.bf16.mxu0 0
        %1765 = vmatpush1.bf16.msra.mxu0 %v1370
        %1766 = vmatprep.subr.bf16.mxu0 0
        %1767 = vmatpush1.bf16.msra.mxu0 %v1371
        %1768 = vmatprep.subr.bf16.mxu0 0
        %1769 = vmatpush1.bf16.msra.mxu0 %v1372
        %1770 = vmatprep.subr.bf16.mxu0 0
        %1771 = vmatpush1.bf16.msra.mxu0 %v1373
        %1772 = vmatprep.subr.bf16.mxu0 0
        %1773 = vmatpush1.bf16.msra.mxu0 %v1374
        %1774 = vmatprep.subr.bf16.mxu0 0
        %1775 = vmatpush1.bf16.msra.mxu0 %v1375
        %1776 = vmatprep.subr.bf16.mxu0 0
        %1777 = vmatpush1.bf16.msra.mxu0 %v1376
        %1778 = vmatprep.subr.bf16.mxu0 0
        %1779 = vmatpush1.bf16.msra.mxu0 %v1377
        %1780 = vmatprep.subr.bf16.mxu0 0
        %1781 = vmatpush1.bf16.msra.mxu0 %v1378
        %1782 = vmatprep.mubr.bf16.mxu0 %v771
        %1783 = vmatmul.mubr.bf16.gmra.mrb[0].mxu0 %v863
        %v1784 = vpop.f32.mrb[0].mxu0
        %v1785 = vadd.f32 %v1688, %v1784
        %v1786 = vpop.f32.mrb[0].mxu0
        %v1787 = vpop.f32.mrb[0].mxu0
        %v1788 = vadd.f32 %v1691, %v1787
        %v1789 = vpop.f32.mrb[0].mxu0
        %1790 = vmatprep.mubr.bf16.mxu0 %v772
        %1791 = vmatmul.mubr.bf16.gmra.mrb[0].mxu0 %v764
        %v1792 = vpop.f32.mrb[0].mxu0
        %v1793 = vadd.f32 %v1696, %v1792
        %v1794 = vpop.f32.mrb[0].mxu0
        %v1795 = vpop.f32.mrb[0].mxu0
        %v1796 = vadd.f32 %v1699, %v1795
        %v1797 = vpop.f32.mrb[0].mxu0
        %1798 = vmatprep.mubr.bf16.mxu0 %v773
        %1799 = vmatmul.mubr.bf16.gmra.mrb[0].mxu0 %v765
        %v1800 = vpop.f32.mrb[0].mxu0
        %v1801 = vadd.f32 %v1704, %v1800
        %v1802 = vpop.f32.mrb[0].mxu0
        %v1803 = vpop.f32.mrb[0].mxu0
        %v1804 = vadd.f32 %v1707, %v1803
        %v1805 = vpop.f32.mrb[0].mxu0
        %1806 = vmatprep.mubr.bf16.mxu0 %v774
        %1807 = vmatmul.mubr.bf16.gmra.mrb[0].mxu0 %v766
        %v1808 = vpop.f32.mrb[0].mxu0
        %v1809 = vadd.f32 %v1712, %v1808
        %v1810 = vpop.f32.mrb[0].mxu0
        %v1811 = vpop.f32.mrb[0].mxu0
        %v1812 = vadd.f32 %v1715, %v1811
        %v1813 = vpop.f32.mrb[0].mxu0
        %1814 = vmatprep.mubr.bf16.mxu0 %v775
        %1815 = vmatmul.mubr.bf16.gmra.mrb[0].mxu0 %v767
        %v1816 = vpop.f32.mrb[0].mxu0
        %v1817 = vadd.f32 %v1720, %v1816
        %v1818 = vpop.f32.mrb[0].mxu0
        %v1819 = vpop.f32.mrb[0].mxu0
        %v1820 = vadd.f32 %v1723, %v1819
        %v1821 = vpop.f32.mrb[0].mxu0
        %1822 = vmatprep.mubr.bf16.mxu0 %v776
        %1823 = vmatmul.mubr.bf16.gmra.mrb[0].mxu0 %v768
        %v1824 = vpop.f32.mrb[0].mxu0
        %v1825 = vadd.f32 %v1728, %v1824
        %v1826 = vpop.f32.mrb[0].mxu0
        %v1827 = vpop.f32.mrb[0].mxu0
        %v1828 = vadd.f32 %v1731, %v1827
        %v1829 = vpop.f32.mrb[0].mxu0
        %1830 = vmatprep.mubr.bf16.mxu0 %v844
        %1831 = vmatmul.mubr.bf16.gmra.mrb[0].mxu0 %v843
        %v1832 = vpop.f32.mrb[0].mxu0
        %v1833 = vadd.f32 %v1736, %v1832
        %v1834 = vpop.f32.mrb[0].mxu0
        %v1835 = vpop.f32.mrb[0].mxu0
        %v1836 = vadd.f32 %v1739, %v1835
        %v1837 = vpop.f32.mrb[0].mxu0
        %1838 = vmatprep.mubr.bf16.mxu0 %v865
        %1839 = vmatmul.mubr.bf16.gmra.mrb[0].mxu0 %v864
        %v1840 = vpop.f32.mrb[0].mxu0
        %v1841 = vadd.f32 %v1744, %v1840
        %v1842 = vpop.f32.mrb[0].mxu0
        %v1843 = vpop.f32.mrb[0].mxu0
        %v1844 = vadd.f32 %v1747, %v1843
        %v1845 = vpop.f32.mrb[0].mxu0
        %1846 = vdwg.mxu0
        %1847 = vmatprep.subr.bf16.mxu0 0
        %1848 = vmatpush1.bf16.msra.mxu0 %v1379
        %1849 = vmatprep.subr.bf16.mxu0 0
        %1850 = vmatpush1.bf16.msra.mxu0 %v1380
        %1851 = vmatprep.subr.bf16.mxu0 0
        %1852 = vmatpush1.bf16.msra.mxu0 %v1381
        %1853 = vmatprep.subr.bf16.mxu0 0
        %1854 = vmatpush1.bf16.msra.mxu0 %v1382
        %1855 = vmatprep.subr.bf16.mxu0 0
        %1856 = vmatpush1.bf16.msra.mxu0 %v1383
        %1857 = vmatprep.subr.bf16.mxu0 0
        %1858 = vmatpush1.bf16.msra.mxu0 %v1384
        %1859 = vmatprep.subr.bf16.mxu0 0
        %1860 = vmatpush1.bf16.msra.mxu0 %v1385
        %1861 = vmatprep.subr.bf16.mxu0 0
        %1862 = vmatpush1.bf16.msra.mxu0 %v1386
        %1863 = vmatprep.subr.bf16.mxu0 0
        %1864 = vmatpush1.bf16.msra.mxu0 0
        %1865 = vmatprep.subr.bf16.mxu0 0
        %1866 = vmatpush1.bf16.msra.mxu0 0
        %1867 = vmatprep.subr.bf16.mxu0 0
        %1868 = vmatpush1.bf16.msra.mxu0 0
        %1869 = vmatprep.subr.bf16.mxu0 0
        %1870 = vmatpush1.bf16.msra.mxu0 0
        %1871 = vmatprep.subr.bf16.mxu0 0
        %1872 = vmatpush1.bf16.msra.mxu0 0
        %1873 = vmatprep.subr.bf16.mxu0 0
        %1874 = vmatpush1.bf16.msra.mxu0 0
        %1875 = vmatprep.subr.bf16.mxu0 0
        %1876 = vmatpush1.bf16.msra.mxu0 0
        %1877 = vmatprep.subr.bf16.mxu0 0
        %1878 = vmatpush1.bf16.msra.mxu0 0
        %1879 = vmatprep.mubr.bf16.mxu0 0
        %1880 = vmatmul.mubr.bf16.gmra.mrb[0].mxu0 %v828
        %v1881 = vpop.f32.mrb[0].mxu0
        %v1882 = vadd.f32 %v1785, %v1881
        %v1883 = vpop.f32.mrb[0].mxu0
        %v1884 = vpop.f32.mrb[0].mxu0
        %v1885 = vadd.f32 %v1788, %v1884
        %v1886 = vpop.f32.mrb[0].mxu0
        %1887 = vmatprep.mubr.bf16.mxu0 0
        %1888 = vmatmul.mubr.bf16.gmra.mrb[0].mxu0 %v829
        %v1889 = vpop.f32.mrb[0].mxu0
        %v1890 = vadd.f32 %v1793, %v1889
        %v1891 = vpop.f32.mrb[0].mxu0
        %v1892 = vpop.f32.mrb[0].mxu0
        %v1893 = vadd.f32 %v1796, %v1892
        %v1894 = vpop.f32.mrb[0].mxu0
        %1895 = vmatprep.mubr.bf16.mxu0 0
        %1896 = vmatmul.mubr.bf16.gmra.mrb[0].mxu0 %v830
        %v1897 = vpop.f32.mrb[0].mxu0
        %v1898 = vadd.f32 %v1801, %v1897
        %v1899 = vpop.f32.mrb[0].mxu0
        %v1900 = vpop.f32.mrb[0].mxu0
        %v1901 = vadd.f32 %v1804, %v1900
        %v1902 = vpop.f32.mrb[0].mxu0
        %1903 = vmatprep.mubr.bf16.mxu0 0
        %1904 = vmatmul.mubr.bf16.gmra.mrb[0].mxu0 %v831
        %v1905 = vpop.f32.mrb[0].mxu0
        %v1906 = vadd.f32 %v1809, %v1905
        %v1907 = vpop.f32.mrb[0].mxu0
        %v1908 = vpop.f32.mrb[0].mxu0
        %v1909 = vadd.f32 %v1812, %v1908
        %v1910 = vpop.f32.mrb[0].mxu0
        %1911 = vmatprep.mubr.bf16.mxu0 0
        %1912 = vmatmul.mubr.bf16.gmra.mrb[0].mxu0 %v832
        %v1913 = vpop.f32.mrb[0].mxu0
        %v1914 = vadd.f32 %v1817, %v1913
        %v1915 = vpop.f32.mrb[0].mxu0
        %v1916 = vpop.f32.mrb[0].mxu0
        %v1917 = vadd.f32 %v1820, %v1916
        %v1918 = vpop.f32.mrb[0].mxu0
        %1919 = vmatprep.mubr.bf16.mxu0 0
        %1920 = vmatmul.mubr.bf16.gmra.mrb[0].mxu0 %v853
        %v1921 = vpop.f32.mrb[0].mxu0
        %v1922 = vadd.f32 %v1825, %v1921
        %v1923 = vpop.f32.mrb[0].mxu0
        %v1924 = vpop.f32.mrb[0].mxu0
        %v1925 = vadd.f32 %v1828, %v1924
        %v1926 = vpop.f32.mrb[0].mxu0
        %1927 = vmatprep.mubr.bf16.mxu0 0
        %1928 = vmatmul.mubr.bf16.gmra.mrb[0].mxu0 %v874
        %v1929 = vpop.f32.mrb[0].mxu0
        %v1930 = vadd.f32 %v1833, %v1929
        %v1931 = vpop.f32.mrb[0].mxu0
        %v1932 = vpop.f32.mrb[0].mxu0
        %v1933 = vadd.f32 %v1836, %v1932
        %v1934 = vpop.f32.mrb[0].mxu0
        %1935 = vmatprep.mubr.bf16.mxu0 0
        %1936 = vmatmul.mubr.bf16.gmra.mrb[0].mxu0 %v875
        %v1937 = vpop.f32.mrb[0].mxu0
        %v1938 = vadd.f32 %v1841, %v1937
        %v1939 = vpop.f32.mrb[0].mxu0
        %v1940 = vpop.f32.mrb[0].mxu0
        %v1941 = vadd.f32 %v1844, %v1940
        %v1942 = vpop.f32.mrb[0].mxu0
        %1943 = vdwg.mxu0
        %v1944 = vmax.f32 %v1882, 0.0
        %v1945 = vmax.f32 %v1885, 0.0
        %v1946 = vmax.f32 %v1890, 0.0
        %v1947 = vmax.f32 %v1893, 0.0
        %v1948 = vmax.f32 %v1898, 0.0
        %v1949 = vmax.f32 %v1901, 0.0
        %v1950 = vmax.f32 %v1906, 0.0
        %v1951 = vmax.f32 %v1909, 0.0
        %v1952 = vmax.f32 %v1914, 0.0
        %v1953 = vmax.f32 %v1917, 0.0
        %v1954 = vmax.f32 %v1922, 0.0
        %v1955 = vmax.f32 %v1925, 0.0
        %v1956 = vmax.f32 %v1930, 0.0
        %v1957 = vmax.f32 %v1933, 0.0
        %v1958 = vmax.f32 %v1938, 0.0
        %v1959 = vmax.f32 %v1941, 0.0
        %v1960 = vpack.c.bf16 %v1945, %v1944
        %v1961 = vpack.c.bf16 %v1947, %v1946
        %v1962 = vpack.c.bf16 %v1949, %v1948
        %v1963 = vpack.c.bf16 %v1951, %v1950
        %v1964 = vpack.c.bf16 %v1953, %v1952
        %v1965 = vpack.c.bf16 %v1955, %v1954
        %v1966 = vpack.c.bf16 %v1957, %v1956
        %v1967 = vpack.c.bf16 %v1959, %v1958
        %v1968 = vld [vmem:[#allocation8] sm:$0xf]
        %v1969 = vld [vmem:[#allocation8 + $0x4] sm:$0xf]
        %v1970 = vld [vmem:[#allocation8 + $0x8] sm:$0xf]
        %v1971 = vld [vmem:[#allocation8 + $0xc] sm:$0xf]
        %v1972 = vld [vmem:[#allocation8 + $0x10] sm:$0xf]
        %v1973 = vld [vmem:[#allocation8 + $0x14] sm:$0xf]
        %v1974 = vld [vmem:[#allocation8 + $0x18] sm:$0xf]
        %v1975 = vld [vmem:[#allocation8 + $0x1c] sm:$0xf]
        %v1976 = vld [vmem:[#allocation8 + $0x20] sm:$0xf]
        %v1977 = vld [vmem:[#allocation8 + $0x24] sm:$0xf]
        %v1978 = vld [vmem:[#allocation8 + $0x28] sm:$0xf]
        %v1979 = vld [vmem:[#allocation8 + $0x2c] sm:$0xf]
        %v1980 = vld [vmem:[#allocation8 + $0x30] sm:$0xf]
        %v1981 = vld [vmem:[#allocation8 + $0x34] sm:$0xf]
        %v1982 = vld [vmem:[#allocation8 + $0x38] sm:$0xf]
        %v1983 = vld [vmem:[#allocation8 + $0x3c] sm:$0xf]
        %s1984 = sadd.s32 %s357, 1
        %s1985 = smul.u32 %s1984, 2
        %s1986 = smul.addr %s1985, 4
        %s1987 = scalar_lea.vmem %s312, %s1986 [#allocation2]
        %v1988 = vld [vmem:[%s1987] sm:$0xf]
        %v1989 = vld [vmem:[%s1987 + $0x4] sm:$0xf]
        %v1990 = vld [vmem:[%s1987 + $0x8] sm:$0xf]
        %v1991 = vld [vmem:[%s1987 + $0xc] sm:$0xf]
        %v1992 = vld [vmem:[%s1987 + $0x10] sm:$0xf]
        %v1993 = vld [vmem:[%s1987 + $0x14] sm:$0xf]
        %v1994 = vld [vmem:[%s1987 + $0x18] sm:$0xf]
        %v1995 = vld [vmem:[%s1987 + $0x1c] sm:$0xf]
        %v1996 = vld [vmem:[%s1987 + $0x20] sm:$0xf]
        %v1997 = vld [vmem:[%s1987 + $0x24] sm:$0xf]
        %v1998 = vld [vmem:[%s1987 + $0x28] sm:$0xf]
        %v1999 = vld [vmem:[%s1987 + $0x2c] sm:$0xf]
        %v2000 = vld [vmem:[%s1987 + $0x30] sm:$0xf]
        %v2001 = vld [vmem:[%s1987 + $0x34] sm:$0xf]
        %v2002 = vld [vmem:[%s1987 + $0x38] sm:$0xf]
        %v2003 = vld [vmem:[%s1987 + $0x3c] sm:$0xf]
        %v2004 = vunpack.c.l.bf16 %v1988
        %v2005 = vunpack.c.l.bf16 %v1989
        %v2006 = vunpack.c.l.bf16 %v1990
        %v2007 = vunpack.c.l.bf16 %v1991
        %v2008 = vunpack.c.l.bf16 %v1992
        %v2009 = vunpack.c.l.bf16 %v1993
        %v2010 = vunpack.c.l.bf16 %v1994
        %v2011 = vunpack.c.l.bf16 %v1995
        %v2012 = vunpack.c.l.bf16 %v1996
        %v2013 = vunpack.c.l.bf16 %v1997
        %v2014 = vunpack.c.l.bf16 %v1998
        %v2015 = vunpack.c.l.bf16 %v1999
        %v2016 = vunpack.c.l.bf16 %v2000
        %v2017 = vunpack.c.l.bf16 %v2001
        %v2018 = vunpack.c.l.bf16 %v2002
        %v2019 = vunpack.c.l.bf16 %v2003
        %v2020 = vld [vmem:[%s6] sm:$0x1]
        %v2022 = vlaneseq
        %v2023 = vshrl.u32 %v2022, 7
        %v2024 = vsub.s32 0, %v2023
        %v2025 = vrot.slane %v2020, %v2024
        %v2043 = vunpack.c.l.b16 %v1968
        %v2044 = vunpack.c.l.b16 %v1969
        %v2045 = vunpack.c.l.b16 %v1970
        %v2046 = vunpack.c.l.b16 %v1971
        %v2047 = vunpack.c.l.b16 %v1972
        %v2048 = vunpack.c.l.b16 %v1973
        %v2049 = vunpack.c.l.b16 %v1974
        %v2050 = vunpack.c.l.b16 %v1975
        %v2051 = vunpack.c.l.b16 %v1976
        %v2052 = vunpack.c.l.b16 %v1977
        %v2053 = vunpack.c.l.b16 %v1978
        %v2054 = vunpack.c.l.b16 %v1979
        %v2055 = vunpack.c.l.b16 %v1980
        %v2056 = vunpack.c.l.b16 %v1981
        %v2057 = vunpack.c.l.b16 %v1982
        %v2058 = vunpack.c.l.b16 %v1983
        %v2059 = vpack.c.b16 %v2044, %v2043
        %v2060 = vpack.c.b16 %v2046, %v2045
        %v2061 = vpack.c.b16 %v2048, %v2047
        %v2062 = vpack.c.b16 %v2050, %v2049
        %v2063 = vpack.c.b16 %v2052, %v2051
        %v2064 = vpack.c.b16 %v2054, %v2053
        %v2065 = vpack.c.b16 %v2056, %v2055
        %v2066 = vpack.c.b16 %v2058, %v2057
        %2075 = vmatprep.subr.bf16.mxu0 0
        %2076 = vmatpush1.bf16.msra.mxu0 %v2059
        %2077 = vmatprep.subr.bf16.mxu0 0
        %2078 = vmatpush1.bf16.msra.mxu0 %v2060
        %2079 = vmatprep.subr.bf16.mxu0 0
        %2080 = vmatpush1.bf16.msra.mxu0 %v2061
        %2081 = vmatprep.subr.bf16.mxu0 0
        %2082 = vmatpush1.bf16.msra.mxu0 %v2062
        %2083 = vmatprep.subr.bf16.mxu0 0
        %2084 = vmatpush1.bf16.msra.mxu0 %v2063
        %2085 = vmatprep.subr.bf16.mxu0 0
        %2086 = vmatpush1.bf16.msra.mxu0 %v2064
        %2087 = vmatprep.subr.bf16.mxu0 0
        %2088 = vmatpush1.bf16.msra.mxu0 %v2065
        %2089 = vmatprep.subr.bf16.mxu0 0
        %2090 = vmatpush1.bf16.msra.mxu0 %v2066
        %2091 = vmatprep.subr.bf16.mxu0 0
        %2092 = vmatpush1.bf16.msra.mxu0 0
        %2093 = vmatprep.subr.bf16.mxu0 0
        %2094 = vmatpush1.bf16.msra.mxu0 0
        %2095 = vmatprep.subr.bf16.mxu0 0
        %2096 = vmatpush1.bf16.msra.mxu0 0
        %2097 = vmatprep.subr.bf16.mxu0 0
        %2098 = vmatpush1.bf16.msra.mxu0 0
        %2099 = vmatprep.subr.bf16.mxu0 0
        %2100 = vmatpush1.bf16.msra.mxu0 0
        %2101 = vmatprep.subr.bf16.mxu0 0
        %2102 = vmatpush1.bf16.msra.mxu0 0
        %2103 = vmatprep.subr.bf16.mxu0 0
        %2104 = vmatpush1.bf16.msra.mxu0 0
        %2105 = vmatprep.subr.bf16.mxu0 0
        %2106 = vmatpush1.bf16.msra.mxu0 0
        %2107 = vmatprep.mubr.bf16.mxu0 0
        %2108 = vmatmul.mubr.bf16.gmra.mrb[0].mxu0 %v1960
        %v2109 = vpop.f32.mrb[0].mxu0
        %v2110 = vadd.f32 %v2025, %v2109
        %v2111 = vpop.f32.mrb[0].mxu0
        %v2112 = vpop.f32.mrb[0].mxu0
        %v2113 = vadd.f32 %v2025, %v2112
        %v2114 = vpop.f32.mrb[0].mxu0
        %2115 = vmatprep.mubr.bf16.mxu0 0
        %2116 = vmatmul.mubr.bf16.gmra.mrb[0].mxu0 %v1961
        %v2117 = vpop.f32.mrb[0].mxu0
        %v2118 = vadd.f32 %v2025, %v2117
        %v2119 = vpop.f32.mrb[0].mxu0
        %v2120 = vpop.f32.mrb[0].mxu0
        %v2121 = vadd.f32 %v2025, %v2120
        %v2122 = vpop.f32.mrb[0].mxu0
        %2123 = vmatprep.mubr.bf16.mxu0 0
        %2124 = vmatmul.mubr.bf16.gmra.mrb[0].mxu0 %v1962
        %v2125 = vpop.f32.mrb[0].mxu0
        %v2126 = vadd.f32 %v2025, %v2125
        %v2127 = vpop.f32.mrb[0].mxu0
        %v2128 = vpop.f32.mrb[0].mxu0
        %v2129 = vadd.f32 %v2025, %v2128
        %v2130 = vpop.f32.mrb[0].mxu0
        %2131 = vmatprep.mubr.bf16.mxu0 0
        %2132 = vmatmul.mubr.bf16.gmra.mrb[0].mxu0 %v1963
        %v2133 = vpop.f32.mrb[0].mxu0
        %v2134 = vadd.f32 %v2025, %v2133
        %v2135 = vpop.f32.mrb[0].mxu0
        %v2136 = vpop.f32.mrb[0].mxu0
        %v2137 = vadd.f32 %v2025, %v2136
        %v2138 = vpop.f32.mrb[0].mxu0
        %2139 = vmatprep.mubr.bf16.mxu0 0
        %2140 = vmatmul.mubr.bf16.gmra.mrb[0].mxu0 %v1964
        %v2141 = vpop.f32.mrb[0].mxu0
        %v2142 = vadd.f32 %v2025, %v2141
        %v2143 = vpop.f32.mrb[0].mxu0
        %v2144 = vpop.f32.mrb[0].mxu0
        %v2145 = vadd.f32 %v2025, %v2144
        %v2146 = vpop.f32.mrb[0].mxu0
        %2147 = vmatprep.mubr.bf16.mxu0 0
        %2148 = vmatmul.mubr.bf16.gmra.mrb[0].mxu0 %v1965
        %v2149 = vpop.f32.mrb[0].mxu0
        %v2150 = vadd.f32 %v2025, %v2149
        %v2151 = vpop.f32.mrb[0].mxu0
        %v2152 = vpop.f32.mrb[0].mxu0
        %v2153 = vadd.f32 %v2025, %v2152
        %v2154 = vpop.f32.mrb[0].mxu0
        %2155 = vmatprep.mubr.bf16.mxu0 0
        %2156 = vmatmul.mubr.bf16.gmra.mrb[0].mxu0 %v1966
        %v2157 = vpop.f32.mrb[0].mxu0
        %v2158 = vadd.f32 %v2025, %v2157
        %v2159 = vpop.f32.mrb[0].mxu0
        %v2160 = vpop.f32.mrb[0].mxu0
        %v2161 = vadd.f32 %v2025, %v2160
        %v2162 = vpop.f32.mrb[0].mxu0
        %2163 = vmatprep.mubr.bf16.mxu0 0
        %2164 = vmatmul.mubr.bf16.gmra.mrb[0].mxu0 %v1967
        %v2165 = vpop.f32.mrb[0].mxu0
        %v2166 = vadd.f32 %v2025, %v2165
        %v2167 = vpop.f32.mrb[0].mxu0
        %v2168 = vpop.f32.mrb[0].mxu0
        %v2169 = vadd.f32 %v2025, %v2168
        %v2170 = vpop.f32.mrb[0].mxu0
        %2171 = vdwg.mxu0
        %v2172 = vadd.f32 %v2110, %v2004
        %v2173 = vadd.f32 %v2113, %v2005
        %v2174 = vadd.f32 %v2118, %v2006
        %v2175 = vadd.f32 %v2121, %v2007
        %v2176 = vadd.f32 %v2126, %v2008
        %v2177 = vadd.f32 %v2129, %v2009
        %v2178 = vadd.f32 %v2134, %v2010
        %v2179 = vadd.f32 %v2137, %v2011
        %v2180 = vadd.f32 %v2142, %v2012
        %v2181 = vadd.f32 %v2145, %v2013
        %v2182 = vadd.f32 %v2150, %v2014
        %v2183 = vadd.f32 %v2153, %v2015
        %v2184 = vadd.f32 %v2158, %v2016
        %v2185 = vadd.f32 %v2161, %v2017
        %v2186 = vadd.f32 %v2166, %v2018
        %v2187 = vadd.f32 %v2169, %v2019
        %v2188 = vmax.f32 %v2172, 0.0
        %v2189 = vmax.f32 %v2173, 0.0
        %v2190 = vmax.f32 %v2174, 0.0
        %v2191 = vmax.f32 %v2175, 0.0
        %v2192 = vmax.f32 %v2176, 0.0
        %v2193 = vmax.f32 %v2177, 0.0
        %v2194 = vmax.f32 %v2178, 0.0
        %v2195 = vmax.f32 %v2179, 0.0
        %v2196 = vmax.f32 %v2180, 0.0
        %v2197 = vmax.f32 %v2181, 0.0
        %v2198 = vmax.f32 %v2182, 0.0
        %v2199 = vmax.f32 %v2183, 0.0
        %v2200 = vmax.f32 %v2184, 0.0
        %v2201 = vmax.f32 %v2185, 0.0
        %v2202 = vmax.f32 %v2186, 0.0
        %v2203 = vmax.f32 %v2187, 0.0
        %2204 = vst [vmem:[%s354] sm:$0xff] %v2188
        %2205 = vst [vmem:[%s354 + $0x8] sm:$0xff] %v2189
        %2206 = vst [vmem:[%s354 + $0x10] sm:$0xff] %v2190
        %2207 = vst [vmem:[%s354 + $0x18] sm:$0xff] %v2191
        %2208 = vst [vmem:[%s354 + $0x20] sm:$0xff] %v2192
        %2209 = vst [vmem:[%s354 + $0x28] sm:$0xff] %v2193
        %2210 = vst [vmem:[%s354 + $0x30] sm:$0xff] %v2194
        %2211 = vst [vmem:[%s354 + $0x38] sm:$0xff] %v2195
        %2212 = vst [vmem:[%s354 + $0x40] sm:$0xff] %v2196
        %2213 = vst [vmem:[%s354 + $0x48] sm:$0xff] %v2197
        %2214 = vst [vmem:[%s354 + $0x50] sm:$0xff] %v2198
        %2215 = vst [vmem:[%s354 + $0x58] sm:$0xff] %v2199
        %2216 = vst [vmem:[%s354 + $0x60] sm:$0xff] %v2200
        %2217 = vst [vmem:[%s354 + $0x68] sm:$0xff] %v2201
        %2218 = vst [vmem:[%s354 + $0x70] sm:$0xff] %v2202
        %2219 = vst [vmem:[%s354 + $0x78] sm:$0xff] %v2203
        %s2220 = sand.u32 %s200, 1
        %s2221 = scalar_lea.sflag [#allocation4], %s2220
        %s2222 = sand.u32 %s200, 1
        %s2223 = smul.addr %s2222, 128
        %s2224 = scalar_lea.vmem [#allocation10], %s2223
        // Predicated region
        $region65: #{tpu_custom_call.1} parent=47 // pred_check
          %p2225 = pneg %p210
        $region66: #{tpu_custom_call.1} parent=47 // pred_check_branch
          %2227 = sbr.rel (%p2225) target = $region68
        $region67: #{tpu_custom_call.1} parent=47 // pred_region
          %s2228 = smul.u32 8, %s31
          %s2230 = ssub.s32 2048, 2048
          %2231 = vsyncadd %s2221, %s2230
          %s2232 = smul.addr %s2228, 2
          %s2233 = smul.addr %s30, 32
          %s2234 = sadd.s32 %s2232, %s2233
          %s2235 = smul.addr %s2234, 128
          %s2236 = scalar_lea.hbm %s7, %s2235
          %s2237 = sshll.u32 %s2224, 4
          %s2238 = int_to_ptr.vmem [resolvable:$true] %s2237
          %2243 = dma.vmem_to_hbm [thread:$0]  %s2238, 2048, %s2236, %s2221, 128, 128, 8
        $region68: #{tpu_custom_call.1} parent=47 // pred_fallthru
          _
      $region48: #{tpu_custom_call.1} parent=5 // pred_fallthru
        _
      %p2244 = scmp.le.s32.totalorder 2, %s21
      // Predicated region
      $region69: #{tpu_custom_call.1} parent=5 // pred_check
        %p2245 = pneg %p2244
      $region70: #{tpu_custom_call.1} parent=5 // pred_check_branch
        %2247 = sbr.rel (%p2245) target = $region72
      $region71: #{tpu_custom_call.1} parent=5 // pred_region
        %s2248 = ssub.s32 %s21, 2
        // Predicated region
        $region73: #{tpu_custom_call.1} parent=71 // pred_check
          %p2249 = pneg %p216
        $region74: #{tpu_custom_call.1} parent=71 // pred_check_branch
          %2251 = sbr.rel (%p2249) target = $region76
        $region75: #{tpu_custom_call.1} parent=71 // pred_region
          %s2252 = sand.u32 %s201, 1
          %s2253 = scalar_lea.sflag [#allocation4], %s2252
          %s2254 = sand.u32 %s201, 1
          %s2255 = smul.addr %s2254, 128
          %s2256 = scalar_lea.vmem [#allocation10], %s2255
          %2257 = dma.done %s2253, 2048
        $region76: #{tpu_custom_call.1} parent=71 // pred_fallthru
          _
      $region72: #{tpu_custom_call.1} parent=5 // pred_fallthru
        _
    $region6: #{tpu_custom_call.1} parent=1 // loop_footer
      %s25 = sadd.s32 1, %s21
    $region7: #{tpu_custom_call.1} parent=1 // loop_footer_branch
      %20 = sbr.rel target = $region3
    $region8: #{tpu_custom_call.1} parent=1 // loop_exit
      _
    %2258 = vsyncpa [#allocation3], 1
    %s2259 = scalar_lea.sflag [#allocation3], 1
    %2260 = vsyncpa %s2259, 1
    %2261 = vsyncpa [#allocation6], 1
    %2262 = vsyncpa [#allocation9], 1
    %2263 = vsyncpa [#allocation4], 1
    %s2264 = scalar_lea.sflag [#allocation4], 1
    %2265 = vsyncpa %s2264, 1

</llo_original>
